<compile_context>
chip_gen: v7x
topology: tpu7x:2x2x1
jax: 0.10.0
libtpu: 0.0.40
codegen_flags: <defaults>
</compile_context>

<pallas_src>
import functools

import jax
import jax.numpy as jnp
from jax.experimental import pallas as pl
from jax.experimental.pallas import tpu as pltpu

EPS = 1e-5


def _vmem_limit_bytes():
    """~70% of physical VMEM, clamped to [32, 96] MiB (works on v5e/v6e/v7x)."""
    try:
        cap = int(pltpu.get_tpu_info().vmem_capacity_bytes)
    except Exception:
        return 32 * 1024 * 1024
    return max(32 * 1024 * 1024, min(96 * 1024 * 1024, (cap * 7) // 10))


def _conv_stats_kernel(xs_ref, w_ref, y_ref, stats_ref, *, KH, W_out, HW):
    # xs_ref:    (1, HP*W_out, KW*C_in) bf16  kw-concatenated, row-flattened image
    # w_ref:     (KH, KW*C_in, C_PAD)   bf16  tap weights (constant map -> fetched once)
    # y_ref:     (1, HW, C_PAD)         bf16  conv output (pre-BN) for this image
    # stats_ref: (1, 2, C_PAD)          f32   per-image (sum, centered sum-of-squares)
    #
    # Rows m..m+HW at offset kh*W_out of the kw-concatenated copy hold
    # [x_pad[b, h+kh, w+0, :], ..., x_pad[b, h+kh, w+KW-1, :]] for output
    # position m = h*W_out + w, so each kh is one (HW, KW*C_in)@(KW*C_in, C_PAD)
    # MXU matmul.  No zero-init / read-modify-write accumulator passes.
    acc = jnp.dot(xs_ref[0, 0:HW, :], w_ref[0],
                  preferred_element_type=jnp.float32)
    for kh in range(1, KH):
        r0 = kh * W_out
        acc = acc + jnp.dot(xs_ref[0, r0:r0 + HW, :], w_ref[kh],
                            preferred_element_type=jnp.float32)

    y_ref[0] = acc.astype(y_ref.dtype)          # single bf16 store of the conv output

    # Per-image centered partials (numerically robust parallel-variance combine
    # happens in the XLA finalize; keeps the grid axis fully "parallel").
    s = jnp.sum(acc, axis=0, keepdims=True)     # (1, C_PAD)
    mu = s * (1.0 / HW)
    d = acc - mu
    stats_ref[0, 0:1, :] = s
    stats_ref[0, 1:2, :] = jnp.sum(d * d, axis=0, keepdims=True)


def _norm_relu_nchw_kernel(y_ref, scale_ref, shift_ref, o_ref, *, C_out):
    # y_ref:     (1, THW, C_PAD) bf16 ; scale/shift: (1, C_PAD) f32
    # o_ref:     (1, C_out, THW) f32  -- final NCHW layout emitted in-kernel.
    y = y_ref[0].astype(jnp.float32)                              # (THW, C_PAD)
    z = jnp.maximum(y * scale_ref[...] + shift_ref[...], 0.0)     # BN fold + ReLU
    zt = jnp.transpose(z, (1, 0))                                 # XLU transpose (slack in mem-bound phase)
    o_ref[0] = zt[:C_out, :]                                      # drop padded channels in-kernel


def conv_norm_relu(x_nchw, weight, bias, gamma, beta, *, padding=1):
    """ConvNormRelu forward. x_nchw: (B, C_in, H, W) -> (B, C_out, H, W)."""
    B, C_in, H, W = x_nchw.shape
    C_out, _, KH, KW = weight.shape
    HP = H + 2 * padding
    WP = W + 2 * padding
    H_out = HP - KH + 1                      # stride 1
    W_out = WP - KW + 1
    HW = H_out * W_out

    # Lane-dense / MXU-N-dense output channels: 128, or a multiple of 256 when
    # C_out > 128 (v6e/v7x MXUs are 256 wide in N; padded lanes ride free).
    C_PAD = 128 if C_out <= 128 else ((C_out + 255) // 256) * 256

    vmem_limit = _vmem_limit_bytes()

    # ---- layout / precision prep (single fused XLA pass) --------------------
    # NCHW -> NHWC, pad, concatenate the KW width-shifted views along channels,
    # cast to bf16 (MXU operand dtype), flatten rows over (padded H, output W).
    x = jnp.transpose(x_nchw, (0, 2, 3, 1))
    x_pad = jnp.pad(x, ((0, 0), (padding, padding), (padding, padding), (0, 0)))
    xs = jnp.concatenate([x_pad[:, :, kw:kw + W_out, :] for kw in range(KW)],
                         axis=-1)                                  # (B, HP, W_out, KW*C_in)
    xs = xs.astype(jnp.bfloat16).reshape(B, HP * W_out, KW * C_in)
    # TODO(synk): duplication-free variant (single padded copy + in-kernel kw
    #             offsets via pl.ds/pl.multiple_of or manual halo DMA) for very
    #             large activations.

    # PyTorch weight (C_out, C_in, KH, KW) -> (KH, KW*C_in, C_PAD), bf16,
    # zero-padded along C_out.  kw is the outer index of the K concat, matching xs.
    w_t = jnp.transpose(weight, (2, 3, 1, 0))                      # (KH, KW, C_in, C_out)
    w_t = jnp.pad(w_t, ((0, 0), (0, 0), (0, 0), (0, C_PAD - C_out)))
    w_t = w_t.astype(jnp.bfloat16).reshape(KH, KW * C_in, C_PAD)

    # Conv bias folded out: training-mode BN subtracts the batch mean, so a
    # per-channel constant bias cancels exactly.
    del bias

    # ---- phase 1: conv (KH matmuls, K = KW*C_in) + per-image BN partials ----
    kernel1 = functools.partial(_conv_stats_kernel, KH=KH, W_out=W_out, HW=HW)
    flops = 2 * B * KH * HW * (KW * C_in) * C_PAD
    bytes_accessed = (xs.size * 2 + w_t.size * 2
                      + B * HW * C_PAD * 2 + B * 2 * C_PAD * 4)
    y_bhwc, stats = pl.pallas_call(
        kernel1,
        grid=(B,),
        in_specs=[
            pl.BlockSpec((1, HP * W_out, KW * C_in), lambda b: (b, 0, 0)),
            pl.BlockSpec((KH, KW * C_in, C_PAD), lambda b: (0, 0, 0)),  # constant -> fetched once
        ],
        out_specs=(
            pl.BlockSpec((1, HW, C_PAD), lambda b: (b, 0, 0)),
            pl.BlockSpec((1, 2, C_PAD), lambda b: (b, 0, 0)),
        ),
        out_shape=(
            jax.ShapeDtypeStruct((B, HW, C_PAD), jnp.bfloat16),   # bf16 intermediate
            jax.ShapeDtypeStruct((B, 2, C_PAD), jnp.float32),
        ),
        compiler_params=pltpu.CompilerParams(
            dimension_semantics=("parallel",),        # v7x: shard images over 2 TCs
            vmem_limit_bytes=vmem_limit,
        ),
        cost_estimate=pl.CostEstimate(flops=flops, transcendentals=0,
                                      bytes_accessed=bytes_accessed),
    )(xs, w_t)

    # ---- finalize BN statistics (tiny per-channel math, XLA) ----------------
    n_img = jnp.float32(HW)
    n_tot = jnp.float32(B * HW)
    g_pad = jnp.pad(gamma.astype(jnp.float32), (0, C_PAD - C_out))
    b_pad = jnp.pad(beta.astype(jnp.float32), (0, C_PAD - C_out))
    sums = stats[:, 0, :]                       # (B, C_PAD)
    m2s = stats[:, 1, :]                        # (B, C_PAD) centered SSQ per image
    mean = jnp.sum(sums, axis=0) / n_tot
    mu_i = sums / n_img
    # Parallel (Chan) combine of per-image centered partials; biased variance.
    var = (jnp.sum(m2s, axis=0) + n_img * jnp.sum((mu_i - mean) ** 2, axis=0)) / n_tot
    var = jnp.maximum(var, 0.0)
    inv = jax.lax.rsqrt(var + EPS)
    scale = (g_pad * inv).reshape(1, C_PAD)                 # out = y*scale + shift
    shift = (b_pad - g_pad * inv * mean).reshape(1, C_PAD)

    # ---- phase 2: fused normalize + ReLU, emits NCHW directly ---------------
    # Row tile: largest lane-dense (multiple-of-128) divisor of HW, capped at
    # 2048 rows; fall back to the whole image if HW is not 128-aligned.
    THW = HW
    if HW % 128 == 0:
        for cand in (2048, 1024, 512, 256, 128):
            if HW % cand == 0:
                THW = cand
                break
    kernel2 = functools.partial(_norm_relu_nchw_kernel, C_out=C_out)
    out_flat = pl.pallas_call(
        kernel2,
        grid=(B, HW // THW),
        in_specs=[
            pl.BlockSpec((1, THW, C_PAD), lambda b, r: (b, r, 0)),
            pl.BlockSpec((1, C_PAD), lambda b, r: (0, 0)),
            pl.BlockSpec((1, C_PAD), lambda b, r: (0, 0)),
        ],
        out_specs=pl.BlockSpec((1, C_out, THW), lambda b, r: (b, 0, r)),
        out_shape=jax.ShapeDtypeStruct((B, C_out, HW), jnp.float32),
        compiler_params=pltpu.CompilerParams(
            dimension_semantics=("parallel", "parallel"),
            vmem_limit_bytes=vmem_limit,
        ),
    )(y_bhwc, scale, shift)

    return out_flat.reshape(B, C_out, H_out, W_out)         # free reshape (already NCHW)


def _reference(x_nchw, weight, bias, gamma, beta, padding=1):
    """Pure-JAX reference: Conv2d (+bias) -> training-mode BatchNorm2d -> ReLU.

    Conv operands are rounded to bf16 to mirror the kernel's MXU operand
    policy; BN math is f32.  (The kernel additionally stores the conv output
    in bf16, so the comparison tolerance is 5e-3.)
    """
    xb = x_nchw.astype(jnp.bfloat16).astype(jnp.float32)
    wb = weight.astype(jnp.bfloat16).astype(jnp.float32)
    y = jax.lax.conv_general_dilated(
        xb, wb, window_strides=(1, 1),
        padding=[(padding, padding), (padding, padding)],
        dimension_numbers=("NCHW", "OIHW", "NCHW"),
    ) + bias.reshape(1, -1, 1, 1)
    mean = jnp.mean(y, axis=(0, 2, 3), keepdims=True)
    var = jnp.mean((y - mean) ** 2, axis=(0, 2, 3), keepdims=True)
    out = gamma.reshape(1, -1, 1, 1) * (y - mean) * jax.lax.rsqrt(var + EPS) \
        + beta.reshape(1, -1, 1, 1)
    return jnp.maximum(out, 0.0)


if __name__ == "__main__":
    # Deterministic synthetic parameters at module-consistent small shapes.
    B, C_in, C_out, H, W = 2, 4, 8, 16, 16
    KH = KW = 3

    key = jax.random.PRNGKey(0)
    kx, kwt, kb, kg, kbt = jax.random.split(key, 5)
    x = jax.random.normal(kx, (B, C_in, H, W), dtype=jnp.float32)
    weight = jax.random.normal(kwt, (C_out, C_in, KH, KW), dtype=jnp.float32) * 0.1
    bias = jax.random.normal(kb, (C_out,), dtype=jnp.float32) * 0.1
    gamma = 1.0 + 0.1 * jax.random.normal(kg, (C_out,), dtype=jnp.float32)
    beta = 0.1 * jax.random.normal(kbt, (C_out,), dtype=jnp.float32)

    forward = jax.jit(conv_norm_relu)
    out = jax.block_until_ready(forward(x, weight, bias, gamma, beta))

    ref = _reference(x, weight, bias, gamma, beta)
    assert out.shape == (B, C_out, H, W)
    # Tolerance accounts for the bf16 intermediate conv activation
    # (|err| <= gamma*inv_std*2^-9*|y|, well under 5e-3 at these magnitudes).
    assert jnp.allclose(out, ref, rtol=5e-3, atol=5e-3), "mismatch vs JAX reference"

    print("KERNEL_OK")
</pallas_src>

<mosaic_0001>
module attributes {stable_mosaic.version = 11 : i64} {
  func.func @_conv_stats_kernel(%arg0: i32, %arg1: memref<1x288x12xbf16, #tpu.memory_space<vmem>>, %arg2: memref<3x12x128xbf16, #tpu.memory_space<vmem>>, %arg3: memref<1x256x128xbf16, #tpu.memory_space<vmem>>, %arg4: memref<1x2x128xf32, #tpu.memory_space<vmem>>) attributes {dimension_semantics = [#tpu.dimension_semantics<parallel>], iteration_bounds = array<i64: 2>, scalar_prefetch = 0 : i64, scratch_operands = 0 : i64, tpu.core_type = #tpu.core_type<tc>, window_params = [{transform_indices = @transform_0, window_bounds = array<i64: 1, 288, 12>}, {pipeline_mode = #tpu.pipeline_mode<synchronous>, transform_indices = @transform_1, window_bounds = array<i64: 3, 12, 128>}, {transform_indices = @transform_2, window_bounds = array<i64: 1, 256, 128>}, {transform_indices = @transform_3, window_bounds = array<i64: 1, 2, 128>}]} {
    %c0 = arith.constant 0 : index
    %c0_0 = arith.constant 0 : index
    %c0_1 = arith.constant 0 : index
    %0 = vector.load %arg1[%c0, %c0_0, %c0_1] : memref<1x288x12xbf16, #tpu.memory_space<vmem>>, vector<1x256x12xbf16>
    %1 = vector.shape_cast %0 : vector<1x256x12xbf16> to vector<256x12xbf16>
    %c0_2 = arith.constant 0 : index
    %c0_3 = arith.constant 0 : index
    %c0_4 = arith.constant 0 : index
    %2 = vector.load %arg2[%c0_2, %c0_3, %c0_4] : memref<3x12x128xbf16, #tpu.memory_space<vmem>>, vector<1x12x128xbf16>
    %3 = vector.shape_cast %2 : vector<1x12x128xbf16> to vector<12x128xbf16>
    %cst = arith.constant dense<0.000000e+00> : vector<256x128xf32>
    %4 = tpu.matmul %1, %3, %cst {dimension_numbers = #tpu.dot_dimension_numbers<[1], [0], [0], [1], [0, 0, 1, 1], [], []>} : vector<256x12xbf16>, vector<12x128xbf16>, vector<256x128xf32> -> vector<256x128xf32>
    %c0_5 = arith.constant 0 : index
    %c16 = arith.constant 16 : index
    %c0_6 = arith.constant 0 : index
    %5 = vector.load %arg1[%c0_5, %c16, %c0_6] : memref<1x288x12xbf16, #tpu.memory_space<vmem>>, vector<1x256x12xbf16>
    %6 = vector.shape_cast %5 : vector<1x256x12xbf16> to vector<256x12xbf16>
    %c1 = arith.constant 1 : index
    %c0_7 = arith.constant 0 : index
    %c0_8 = arith.constant 0 : index
    %7 = vector.load %arg2[%c1, %c0_7, %c0_8] : memref<3x12x128xbf16, #tpu.memory_space<vmem>>, vector<1x12x128xbf16>
    %8 = vector.shape_cast %7 : vector<1x12x128xbf16> to vector<12x128xbf16>
    %cst_9 = arith.constant dense<0.000000e+00> : vector<256x128xf32>
    %9 = tpu.matmul %6, %8, %cst_9 {dimension_numbers = #tpu.dot_dimension_numbers<[1], [0], [0], [1], [0, 0, 1, 1], [], []>} : vector<256x12xbf16>, vector<12x128xbf16>, vector<256x128xf32> -> vector<256x128xf32>
    %10 = arith.addf %4, %9 : vector<256x128xf32>
    %c0_10 = arith.constant 0 : index
    %c32 = arith.constant 32 : index
    %c0_11 = arith.constant 0 : index
    %11 = vector.load %arg1[%c0_10, %c32, %c0_11] : memref<1x288x12xbf16, #tpu.memory_space<vmem>>, vector<1x256x12xbf16>
    %12 = vector.shape_cast %11 : vector<1x256x12xbf16> to vector<256x12xbf16>
    %c2 = arith.constant 2 : index
    %c0_12 = arith.constant 0 : index
    %c0_13 = arith.constant 0 : index
    %13 = vector.load %arg2[%c2, %c0_12, %c0_13] : memref<3x12x128xbf16, #tpu.memory_space<vmem>>, vector<1x12x128xbf16>
    %14 = vector.shape_cast %13 : vector<1x12x128xbf16> to vector<12x128xbf16>
    %cst_14 = arith.constant dense<0.000000e+00> : vector<256x128xf32>
    %15 = tpu.matmul %12, %14, %cst_14 {dimension_numbers = #tpu.dot_dimension_numbers<[1], [0], [0], [1], [0, 0, 1, 1], [], []>} : vector<256x12xbf16>, vector<12x128xbf16>, vector<256x128xf32> -> vector<256x128xf32>
    %16 = arith.addf %10, %15 : vector<256x128xf32>
    %17 = arith.truncf %16 : vector<256x128xf32> to vector<256x128xbf16>
    %c0_15 = arith.constant 0 : index
    %c0_16 = arith.constant 0 : index
    %c0_17 = arith.constant 0 : index
    %18 = vector.load %arg3[%c0_15, %c0_16, %c0_17] : memref<1x256x128xbf16, #tpu.memory_space<vmem>>, vector<1x256x128xbf16>
    %19 = vector.shape_cast %18 : vector<1x256x128xbf16> to vector<256x128xbf16>
    %20 = vector.shape_cast %17 : vector<256x128xbf16> to vector<1x256x128xbf16>
    tpu.vector_store %arg3[%c0_15, %c0_16, %c0_17], %20 {strides = array<i32>} : memref<1x256x128xbf16, #tpu.memory_space<vmem>>, vector<1x256x128xbf16>,
    %cst_18 = arith.constant dense<0.000000e+00> : vector<128xf32>
    %21 = vector.multi_reduction <add>, %16, %cst_18 [0] : vector<256x128xf32> to vector<128xf32>
    %22 = vector.shape_cast %21 : vector<128xf32> to vector<1x128xf32>
    %cst_19 = arith.constant 3.906250e-03 : f32
    %23 = vector.broadcast %cst_19 : f32 to vector<1x128xf32>
    %24 = arith.mulf %22, %23 : vector<1x128xf32>
    %25 = vector.broadcast %24 : vector<1x128xf32> to vector<256x128xf32>
    %26 = arith.subf %16, %25 : vector<256x128xf32>
    %c0_20 = arith.constant 0 : index
    %c0_21 = arith.constant 0 : index
    %c0_22 = arith.constant 0 : index
    %27 = vector.load %arg4[%c0_20, %c0_21, %c0_22] : memref<1x2x128xf32, #tpu.memory_space<vmem>>, vector<1x1x128xf32>
    %28 = vector.shape_cast %27 : vector<1x1x128xf32> to vector<1x128xf32>
    %29 = vector.shape_cast %22 : vector<1x128xf32> to vector<1x1x128xf32>
    tpu.vector_store %arg4[%c0_20, %c0_21, %c0_22], %29 {strides = array<i32>} : memref<1x2x128xf32, #tpu.memory_space<vmem>>, vector<1x1x128xf32>,
    %30 = arith.mulf %26, %26 : vector<256x128xf32>
    %cst_23 = arith.constant dense<0.000000e+00> : vector<128xf32>
    %31 = vector.multi_reduction <add>, %30, %cst_23 [0] : vector<256x128xf32> to vector<128xf32>
    %32 = vector.shape_cast %31 : vector<128xf32> to vector<1x128xf32>
    %c0_24 = arith.constant 0 : index
    %c1_25 = arith.constant 1 : index
    %c0_26 = arith.constant 0 : index
    %33 = vector.load %arg4[%c0_24, %c1_25, %c0_26] : memref<1x2x128xf32, #tpu.memory_space<vmem>>, vector<1x1x128xf32>
    %34 = vector.shape_cast %33 : vector<1x1x128xf32> to vector<1x128xf32>
    %35 = vector.shape_cast %32 : vector<1x128xf32> to vector<1x1x128xf32>
    tpu.vector_store %arg4[%c0_24, %c1_25, %c0_26], %35 {strides = array<i32>} : memref<1x2x128xf32, #tpu.memory_space<vmem>>, vector<1x1x128xf32>,
    return
  }
  func.func @transform_0(%arg0: i32) -> (i32, i32, i32) {
    %c0_i32 = arith.constant 0 : i32
    %c0_i32_0 = arith.constant 0 : i32
    %c0_i32_1 = arith.constant 0 : i32
    return %arg0, %c0_i32, %c0_i32_0 : i32, i32, i32
  }
  func.func @transform_1(%arg0: i32) -> (i32, i32, i32) {
    %c0_i32 = arith.constant 0 : i32
    %c0_i32_0 = arith.constant 0 : i32
    %c0_i32_1 = arith.constant 0 : i32
    %c0_i32_2 = arith.constant 0 : i32
    return %c0_i32, %c0_i32_0, %c0_i32_1 : i32, i32, i32
  }
  func.func @transform_2(%arg0: i32) -> (i32, i32, i32) {
    %c0_i32 = arith.constant 0 : i32
    %c0_i32_0 = arith.constant 0 : i32
    %c0_i32_1 = arith.constant 0 : i32
    return %arg0, %c0_i32, %c0_i32_0 : i32, i32, i32
  }
  func.func @transform_3(%arg0: i32) -> (i32, i32, i32) {
    %c0_i32 = arith.constant 0 : i32
    %c0_i32_0 = arith.constant 0 : i32
    %c0_i32_1 = arith.constant 0 : i32
    return %arg0, %c0_i32, %c0_i32_0 : i32, i32, i32
  }
}

module attributes {stable_mosaic.version = 11 : i64} {
  func.func @_norm_relu_nchw_kernel(%arg0: i32, %arg1: i32, %arg2: memref<1x256x128xbf16, #tpu.memory_space<vmem>>, %arg3: memref<1x128xf32, #tpu.memory_space<vmem>>, %arg4: memref<1x128xf32, #tpu.memory_space<vmem>>, %arg5: memref<1x8x256xf32, #tpu.memory_space<vmem>>) attributes {dimension_semantics = [#tpu.dimension_semantics<parallel>, #tpu.dimension_semantics<parallel>], iteration_bounds = array<i64: 2, 1>, scalar_prefetch = 0 : i64, scratch_operands = 0 : i64, tpu.core_type = #tpu.core_type<tc>, window_params = [{transform_indices = @transform_0, window_bounds = array<i64: 1, 256, 128>}, {pipeline_mode = #tpu.pipeline_mode<synchronous>, transform_indices = @transform_1, window_bounds = array<i64: 1, 128>}, {pipeline_mode = #tpu.pipeline_mode<synchronous>, transform_indices = @transform_2, window_bounds = array<i64: 1, 128>}, {transform_indices = @transform_3, window_bounds = array<i64: 1, 8, 256>}]} {
    %c0 = arith.constant 0 : index
    %c0_0 = arith.constant 0 : index
    %c0_1 = arith.constant 0 : index
    %0 = vector.load %arg2[%c0, %c0_0, %c0_1] : memref<1x256x128xbf16, #tpu.memory_space<vmem>>, vector<1x256x128xbf16>
    %1 = vector.shape_cast %0 : vector<1x256x128xbf16> to vector<256x128xbf16>
    %2 = arith.extf %1 : vector<256x128xbf16> to vector<256x128xf32>
    %c0_2 = arith.constant 0 : index
    %c0_3 = arith.constant 0 : index
    %3 = vector.load %arg3[%c0_2, %c0_3] : memref<1x128xf32, #tpu.memory_space<vmem>>, vector<1x128xf32>
    %4 = vector.broadcast %3 : vector<1x128xf32> to vector<256x128xf32>
    %5 = arith.mulf %2, %4 : vector<256x128xf32>
    %c0_4 = arith.constant 0 : index
    %c0_5 = arith.constant 0 : index
    %6 = vector.load %arg4[%c0_4, %c0_5] : memref<1x128xf32, #tpu.memory_space<vmem>>, vector<1x128xf32>
    %7 = vector.broadcast %6 : vector<1x128xf32> to vector<256x128xf32>
    %8 = arith.addf %5, %7 : vector<256x128xf32>
    %cst = arith.constant 0.000000e+00 : f32
    %9 = vector.broadcast %cst : f32 to vector<256x128xf32>
    %10 = arith.maximumf %8, %9 : vector<256x128xf32>
    %11 = tpu.transpose %10, [1, 0] : vector<256x128xf32> -> vector<128x256xf32>
    %12 = vector.extract_strided_slice %11 {offsets = [0, 0], sizes = [8, 256], strides = [1, 1]} : vector<128x256xf32> to vector<8x256xf32>
    %c0_6 = arith.constant 0 : index
    %c0_7 = arith.constant 0 : index
    %c0_8 = arith.constant 0 : index
    %13 = vector.load %arg5[%c0_6, %c0_7, %c0_8] : memref<1x8x256xf32, #tpu.memory_space<vmem>>, vector<1x8x256xf32>
    %14 = vector.shape_cast %13 : vector<1x8x256xf32> to vector<8x256xf32>
    %15 = vector.shape_cast %12 : vector<8x256xf32> to vector<1x8x256xf32>
    tpu.vector_store %arg5[%c0_6, %c0_7, %c0_8], %15 {strides = array<i32>} : memref<1x8x256xf32, #tpu.memory_space<vmem>>, vector<1x8x256xf32>,
    return
  }
  func.func @transform_0(%arg0: i32, %arg1: i32) -> (i32, i32, i32) {
    %c0_i32 = arith.constant 0 : i32
    %c0_i32_0 = arith.constant 0 : i32
    return %arg0, %arg1, %c0_i32 : i32, i32, i32
  }
  func.func @transform_1(%arg0: i32, %arg1: i32) -> (i32, i32) {
    %c0_i32 = arith.constant 0 : i32
    %c0_i32_0 = arith.constant 0 : i32
    %c0_i32_1 = arith.constant 0 : i32
    return %c0_i32, %c0_i32_0 : i32, i32
  }
  func.func @transform_2(%arg0: i32, %arg1: i32) -> (i32, i32) {
    %c0_i32 = arith.constant 0 : i32
    %c0_i32_0 = arith.constant 0 : i32
    %c0_i32_1 = arith.constant 0 : i32
    return %c0_i32, %c0_i32_0 : i32, i32
  }
  func.func @transform_3(%arg0: i32, %arg1: i32) -> (i32, i32, i32) {
    %c0_i32 = arith.constant 0 : i32
    %c0_i32_0 = arith.constant 0 : i32
    return %arg0, %c0_i32, %arg1 : i32, i32, i32
  }
}

</mosaic_0001>

<llo_original>
// kernel: conv_norm_relu.3
$region0: #{conv_norm_relu.3}
  #allocation0 [shape = 'u32[]', space=smem, size = 0x4, offset = 0x4, fixed_abs, tag = 'smem constant byte address 0x4 - core index']
  #allocation1 [shape = 'u32[144,128]{1,0:T(1,128)}', space=vmem, size = 0x12000, scoped, tag = 'internal scratch']
  %s0 = inlined_call_operand.vmem [shape: bf16[2,256,128], index: 0, kind: input, shape index: {}]
  %s1 = inlined_call_operand.vmem [shape: f32[1,128], index: 1, kind: input, shape index: {}]
  %s2 = inlined_call_operand.vmem [shape: f32[1,128], index: 2, kind: input, shape index: {}]
  %s3 = inlined_call_operand.vmem [shape: f32[2,8,256], index: 3, kind: output, shape index: {}]
  %s4 = sld [smem:[#allocation0]]
  $region45: #{conv_norm_relu.3} parent=0
    _
  %s6 = ssub.s32 1, %s4
  %s7 = scalar_select 0, %s6, %s4
  loop: start=0, step=1, limit=4
  $region2: #{conv_norm_relu.3} parent=0 // loop_pre_header
    _
  $region3: #{conv_norm_relu.3} parent=0 // loop_header
    %s9 = sphi 0, %s13
    %p10 = scmp.ge.s32.totalorder %s9, 4
    %s16 = sphi 0, %s28
    %s17 = sphi 0, %s24
    %s18 = sphi 0, %s16
    %s19 = sphi 0, %s17
    %s20 = sphi 0, %s18
    %s21 = sphi 0, %s19
    %s33 = sphi 0, %s35
    %s36 = sphi 0, %s33
    %s37 = sphi 0, %s36
    %s53 = sphi 0, %s37
    %s57 = sphi 0, %s57
    %s59 = sphi 0, %s57
    %s60 = sphi 0, %s59
    %s74 = sphi 0, %s60
    %s78 = sphi 0, %s78
    %s80 = sphi 0, %s78
    %s81 = sphi 0, %s80
    %s95 = sphi 0, %s81
    %s103 = sphi 0, %s105
    %s106 = sphi 0, %s103
    %s107 = sphi 0, %s106
    %s123 = sphi 0, %s107
  $region4: #{conv_norm_relu.3} parent=0 // loop_header_branch
    %12 = sbr.rel (%p10) target = $region8
  $region5: #{conv_norm_relu.3} parent=0 // loop_body
    %s14 = ssub.s32 %s9, 1
    %s15 = ssub.s32 %s9, 2
    %s22 = sadd.s32 1, %s17
    %p23 = scmp.ge.s32.totalorder %s22, 1
    %s24 = scalar_select %p23, 0, %s22
    %s25 = sadd.s32 1, %s16
    %s26 = scalar_select %p23, %s25, %s16
    %p27 = scmp.ge.s32.totalorder %s26, 2
    %s28 = scalar_select %p27, 0, %s26
    %s29 = ssub.s32 %s16, %s28
    %s30 = ssub.s32 %s17, %s24
    %s31 = sor.u32 %s29, %s30
    %p32 = scmp.eq.s32.totalorder %s31, 0
    %s34 = sadd.s32 %s33, 1
    %s35 = scalar_select %p32, %s33, %s34
    %p38 = pneg %p32
    %p39 = scmp.eq.s32.totalorder %s9, 1
    %p40 = por %p38, %p39
    %p41 = scmp.ne.s32.totalorder %s33, %s36
    %p42 = scmp.eq.s32.totalorder %s9, 0
    %p43 = por %p41, %p42
    %p44 = scmp.ne.s32.totalorder %s33, %s36
    %p45 = scmp.eq.s32.totalorder %s14, 1
    %p46 = por %p44, %p45
    %p47 = scmp.ne.s32.totalorder %s36, %s37
    %p48 = scmp.eq.s32.totalorder %s14, 0
    %p49 = por %p47, %p48
    %p50 = scmp.ne.s32.totalorder %s36, %s37
    %p51 = scmp.eq.s32.totalorder %s15, 1
    %p52 = por %p50, %p51
    %p54 = scmp.ne.s32.totalorder %s37, %s53
    %p55 = scmp.eq.s32.totalorder %s15, 0
    %p56 = por %p54, %p55
    %s58 = sadd.s32 %s57, 1
    %p61 = scmp.eq.s32.totalorder %s9, 1
    %p62 = scmp.ne.s32.totalorder %s57, %s59
    %p63 = scmp.eq.s32.totalorder %s9, 0
    %p64 = por %p62, %p63
    %p65 = scmp.ne.s32.totalorder %s57, %s59
    %p66 = scmp.eq.s32.totalorder %s14, 1
    %p67 = por %p65, %p66
    %p68 = scmp.ne.s32.totalorder %s59, %s60
    %p69 = scmp.eq.s32.totalorder %s14, 0
    %p70 = por %p68, %p69
    %p71 = scmp.ne.s32.totalorder %s59, %s60
    %p72 = scmp.eq.s32.totalorder %s15, 1
    %p73 = por %p71, %p72
    %p75 = scmp.ne.s32.totalorder %s60, %s74
    %p76 = scmp.eq.s32.totalorder %s15, 0
    %p77 = por %p75, %p76
    %s79 = sadd.s32 %s78, 1
    %p82 = scmp.eq.s32.totalorder %s9, 1
    %p83 = scmp.ne.s32.totalorder %s78, %s80
    %p84 = scmp.eq.s32.totalorder %s9, 0
    %p85 = por %p83, %p84
    %p86 = scmp.ne.s32.totalorder %s78, %s80
    %p87 = scmp.eq.s32.totalorder %s14, 1
    %p88 = por %p86, %p87
    %p89 = scmp.ne.s32.totalorder %s80, %s81
    %p90 = scmp.eq.s32.totalorder %s14, 0
    %p91 = por %p89, %p90
    %p92 = scmp.ne.s32.totalorder %s80, %s81
    %p93 = scmp.eq.s32.totalorder %s15, 1
    %p94 = por %p92, %p93
    %p96 = scmp.ne.s32.totalorder %s81, %s95
    %p97 = scmp.eq.s32.totalorder %s15, 0
    %p98 = por %p96, %p97
    %s99 = ssub.s32 %s16, %s28
    %s100 = ssub.s32 %s17, %s24
    %s101 = sor.u32 %s99, %s100
    %p102 = scmp.eq.s32.totalorder %s101, 0
    %s104 = sadd.s32 %s103, 1
    %s105 = scalar_select %p102, %s103, %s104
    %p108 = pneg %p102
    %p109 = scmp.eq.s32.totalorder %s9, 1
    %p110 = por %p108, %p109
    %p111 = scmp.ne.s32.totalorder %s103, %s106
    %p112 = scmp.eq.s32.totalorder %s9, 0
    %p113 = por %p111, %p112
    %p114 = scmp.ne.s32.totalorder %s103, %s106
    %p115 = scmp.eq.s32.totalorder %s14, 1
    %p116 = por %p114, %p115
    %p117 = scmp.ne.s32.totalorder %s106, %s107
    %p118 = scmp.eq.s32.totalorder %s14, 0
    %p119 = por %p117, %p118
    %p120 = scmp.ne.s32.totalorder %s106, %s107
    %p121 = scmp.eq.s32.totalorder %s15, 1
    %p122 = por %p120, %p121
    %p124 = scmp.ne.s32.totalorder %s107, %s123
    %p125 = scmp.eq.s32.totalorder %s15, 0
    %p126 = por %p124, %p125
    %p127 = scmp.le.s32.totalorder 1, %s9
    %p128 = scmp.lt.s32.totalorder %s9, 3
    %p129 = pnand %p127, %p128
    %p130 = pneg %p129
    // Predicated region
    $region9: #{conv_norm_relu.3} parent=5 // pred_check
      _
    $region10: #{conv_norm_relu.3} parent=5 // pred_check_branch
      %132 = sbr.rel (%p129) target = $region12
    $region11: #{conv_norm_relu.3} parent=5 // pred_region
      %s133 = ssub.s32 %s9, 1
      // Predicated region
      $region13: #{conv_norm_relu.3} parent=11 // pred_check
        %p134 = pneg %p70
      $region14: #{conv_norm_relu.3} parent=11 // pred_check_branch
        %136 = sbr.rel (%p134) target = $region16
      $region15: #{conv_norm_relu.3} parent=11 // pred_region
        _
      $region16: #{conv_norm_relu.3} parent=11 // pred_fallthru
        _
      // Predicated region
      $region17: #{conv_norm_relu.3} parent=11 // pred_check
        %p137 = pneg %p91
      $region18: #{conv_norm_relu.3} parent=11 // pred_check_branch
        %139 = sbr.rel (%p137) target = $region20
      $region19: #{conv_norm_relu.3} parent=11 // pred_region
        _
      $region20: #{conv_norm_relu.3} parent=11 // pred_fallthru
        _
    $region12: #{conv_norm_relu.3} parent=5 // pred_fallthru
      _
    %p140 = scmp.lt.s32.totalorder %s9, 2
    // Predicated region
    $region21: #{conv_norm_relu.3} parent=5 // pred_check
      %p141 = pneg %p140
    $region22: #{conv_norm_relu.3} parent=5 // pred_check_branch
      %143 = sbr.rel (%p141) target = $region24
    $region23: #{conv_norm_relu.3} parent=5 // pred_region
      // Predicated region
      $region25: #{conv_norm_relu.3} parent=23 // pred_check
        %p144 = pneg %p43
      $region26: #{conv_norm_relu.3} parent=23 // pred_check_branch
        %146 = sbr.rel (%p144) target = $region28
      $region27: #{conv_norm_relu.3} parent=23 // pred_region
        %s147 = smul.u32 32, %s17
        %p148 = scmp.lt.s32.totalorder %s16, 1
        %s149 = scalar_select %p148, %s16, 1
        %p150 = scmp.lt.s32.totalorder %s147, 31
        %s151 = scalar_select %p150, %s147, 31
        %s152 = smul.addr %s149, 32
        %s153 = sadd.s32 %s151, %s152
        %s154 = smul.addr %s153, 4
        %s155 = scalar_lea.vmem %s0, %s154
        %s156 = smul.u32 32, %s17
      $region28: #{conv_norm_relu.3} parent=23 // pred_fallthru
        _
    $region24: #{conv_norm_relu.3} parent=5 // pred_fallthru
      _
    %p157 = scmp.le.s32.totalorder 1, %s9
    %p158 = scmp.lt.s32.totalorder %s9, 3
    %p159 = pnand %p157, %p158
    %p160 = pneg %p159
    // Predicated region
    $region29: #{conv_norm_relu.3} parent=5 // pred_check
      _
    $region30: #{conv_norm_relu.3} parent=5 // pred_check_branch
      %162 = sbr.rel (%p159) target = $region32
    $region31: #{conv_norm_relu.3} parent=5 // pred_region
      %s163 = ssub.s32 %s9, 1
      %s164 = smul.u32 32, %s19
      %p165 = scmp.lt.s32.totalorder %s18, 1
      %s166 = scalar_select %p165, %s18, 1
      %p167 = scmp.lt.s32.totalorder %s164, 31
      %s168 = scalar_select %p167, %s164, 31
      %s169 = smul.addr %s166, 32
      %s170 = sadd.s32 %s168, %s169
      %s171 = smul.addr %s170, 4
      %s172 = scalar_lea.vmem %s0, %s171
      %p173 = pneg %p49
      %p174 = pneg %p46
      %p175 = pneg %p70
      %p176 = pneg %p67
      %p177 = pneg %p91
      %p178 = pneg %p88
      %p179 = pneg %p119
      %p180 = pneg %p116
      %s181 = smul.u32 2, %s19
      %p182 = scmp.lt.s32.totalorder %s18, 1
      %s183 = scalar_select %p182, %s18, 1
      %p184 = scmp.lt.s32.totalorder %s181, 1
      %s185 = scalar_select %p184, %s181, 1
      %s186 = smul.addr %s183, 2
      %s187 = sadd.s32 %s185, %s186
      %s188 = smul.addr %s187, 8
      %s189 = scalar_lea.vmem %s3, %s188
      %s190 = smul.u32 32, %s19
      %p191 = scmp.lt.s32.totalorder %s18, 1
      %s192 = scalar_select %p191, %s18, 1
      %p193 = scmp.lt.s32.totalorder %s190, 31
      %s194 = scalar_select %p193, %s190, 31
      %s195 = smul.addr %s192, 32
      %s196 = sadd.s32 %s194, %s195
      %s197 = smul.addr %s196, 4
      %s198 = scalar_lea.vmem %s0, %s197
      %s199 = smul.u32 32, %s19
      %s200 = smul.u32 2, %s19
      %p201 = scmp.lt.s32.totalorder %s18, 1
      %s202 = scalar_select %p201, %s18, 1
      %p203 = scmp.lt.s32.totalorder %s200, 1
      %s204 = scalar_select %p203, %s200, 1
      %s205 = smul.addr %s202, 2
      %s206 = sadd.s32 %s204, %s205
      %s207 = smul.addr %s206, 8
      %s208 = scalar_lea.vmem %s3, %s207
      %s209 = smul.u32 2, %s19
      %v210 = vld [vmem:[%s198] sm:$0xf]
      %v211 = vld [vmem:[%s198 + $0x4] sm:$0xf]
      %v212 = vld [vmem:[%s198 + $0x8] sm:$0xf]
      %v213 = vld [vmem:[%s198 + $0xc] sm:$0xf]
      %v214 = vld [vmem:[%s198 + $0x10] sm:$0xf]
      %v215 = vld [vmem:[%s198 + $0x14] sm:$0xf]
      %v216 = vld [vmem:[%s198 + $0x18] sm:$0xf]
      %v217 = vld [vmem:[%s198 + $0x1c] sm:$0xf]
      %v218 = vld [vmem:[%s198 + $0x20] sm:$0xf]
      %v219 = vld [vmem:[%s198 + $0x24] sm:$0xf]
      %v220 = vld [vmem:[%s198 + $0x28] sm:$0xf]
      %v221 = vld [vmem:[%s198 + $0x2c] sm:$0xf]
      %v222 = vld [vmem:[%s198 + $0x30] sm:$0xf]
      %v223 = vld [vmem:[%s198 + $0x34] sm:$0xf]
      %v224 = vld [vmem:[%s198 + $0x38] sm:$0xf]
      %v225 = vld [vmem:[%s198 + $0x3c] sm:$0xf]
      %v226 = vld [vmem:[%s198 + $0x40] sm:$0xf]
      %v227 = vld [vmem:[%s198 + $0x44] sm:$0xf]
      %v228 = vld [vmem:[%s198 + $0x48] sm:$0xf]
      %v229 = vld [vmem:[%s198 + $0x4c] sm:$0xf]
      %v230 = vld [vmem:[%s198 + $0x50] sm:$0xf]
      %v231 = vld [vmem:[%s198 + $0x54] sm:$0xf]
      %v232 = vld [vmem:[%s198 + $0x58] sm:$0xf]
      %v233 = vld [vmem:[%s198 + $0x5c] sm:$0xf]
      %v234 = vld [vmem:[%s198 + $0x60] sm:$0xf]
      %v235 = vld [vmem:[%s198 + $0x64] sm:$0xf]
      %v236 = vld [vmem:[%s198 + $0x68] sm:$0xf]
      %v237 = vld [vmem:[%s198 + $0x6c] sm:$0xf]
      %v238 = vld [vmem:[%s198 + $0x70] sm:$0xf]
      %v239 = vld [vmem:[%s198 + $0x74] sm:$0xf]
      %v240 = vld [vmem:[%s198 + $0x78] sm:$0xf]
      %v241 = vld [vmem:[%s198 + $0x7c] sm:$0xf]
      %v242 = vunpack.c.l.bf16 %v210
      %v243 = vunpack.c.l.bf16 %v211
      %v244 = vunpack.c.l.bf16 %v212
      %v245 = vunpack.c.l.bf16 %v213
      %v246 = vunpack.c.l.bf16 %v214
      %v247 = vunpack.c.l.bf16 %v215
      %v248 = vunpack.c.l.bf16 %v216
      %v249 = vunpack.c.l.bf16 %v217
      %v250 = vunpack.c.l.bf16 %v218
      %v251 = vunpack.c.l.bf16 %v219
      %v252 = vunpack.c.l.bf16 %v220
      %v253 = vunpack.c.l.bf16 %v221
      %v254 = vunpack.c.l.bf16 %v222
      %v255 = vunpack.c.l.bf16 %v223
      %v256 = vunpack.c.l.bf16 %v224
      %v257 = vunpack.c.l.bf16 %v225
      %v258 = vunpack.c.l.bf16 %v226
      %v259 = vunpack.c.l.bf16 %v227
      %v260 = vunpack.c.l.bf16 %v228
      %v261 = vunpack.c.l.bf16 %v229
      %v262 = vunpack.c.l.bf16 %v230
      %v263 = vunpack.c.l.bf16 %v231
      %v264 = vunpack.c.l.bf16 %v232
      %v265 = vunpack.c.l.bf16 %v233
      %v266 = vunpack.c.l.bf16 %v234
      %v267 = vunpack.c.l.bf16 %v235
      %v268 = vunpack.c.l.bf16 %v236
      %v269 = vunpack.c.l.bf16 %v237
      %v270 = vunpack.c.l.bf16 %v238
      %v271 = vunpack.c.l.bf16 %v239
      %v272 = vunpack.c.l.bf16 %v240
      %v273 = vunpack.c.l.bf16 %v241
      %v274 = vld [vmem:[%s1] sm:$0x1]
      %v276 = vlaneseq
      %v277 = vshrl.u32 %v276, 7
      %v278 = vsub.s32 0, %v277
      %v279 = vrot.slane %v274, %v278
      %v281 = vmul.f32 %v242, %v279
      %v282 = vmul.f32 %v243, %v279
      %v283 = vmul.f32 %v244, %v279
      %v284 = vmul.f32 %v245, %v279
      %v285 = vmul.f32 %v246, %v279
      %v286 = vmul.f32 %v247, %v279
      %v287 = vmul.f32 %v248, %v279
      %v288 = vmul.f32 %v249, %v279
      %v289 = vmul.f32 %v250, %v279
      %v290 = vmul.f32 %v251, %v279
      %v291 = vmul.f32 %v252, %v279
      %v292 = vmul.f32 %v253, %v279
      %v293 = vmul.f32 %v254, %v279
      %v294 = vmul.f32 %v255, %v279
      %v295 = vmul.f32 %v256, %v279
      %v296 = vmul.f32 %v257, %v279
      %v297 = vmul.f32 %v258, %v279
      %v298 = vmul.f32 %v259, %v279
      %v299 = vmul.f32 %v260, %v279
      %v300 = vmul.f32 %v261, %v279
      %v301 = vmul.f32 %v262, %v279
      %v302 = vmul.f32 %v263, %v279
      %v303 = vmul.f32 %v264, %v279
      %v304 = vmul.f32 %v265, %v279
      %v305 = vmul.f32 %v266, %v279
      %v306 = vmul.f32 %v267, %v279
      %v307 = vmul.f32 %v268, %v279
      %v308 = vmul.f32 %v269, %v279
      %v309 = vmul.f32 %v270, %v279
      %v310 = vmul.f32 %v271, %v279
      %v311 = vmul.f32 %v272, %v279
      %v312 = vmul.f32 %v273, %v279
      %v313 = vld [vmem:[%s2] sm:$0x1]
      %v315 = vlaneseq
      %v316 = vshrl.u32 %v315, 7
      %v317 = vsub.s32 0, %v316
      %v318 = vrot.slane %v313, %v317
      %v320 = vadd.f32 %v281, %v318
      %v321 = vadd.f32 %v282, %v318
      %v322 = vadd.f32 %v283, %v318
      %v323 = vadd.f32 %v284, %v318
      %v324 = vadd.f32 %v285, %v318
      %v325 = vadd.f32 %v286, %v318
      %v326 = vadd.f32 %v287, %v318
      %v327 = vadd.f32 %v288, %v318
      %v328 = vadd.f32 %v289, %v318
      %v329 = vadd.f32 %v290, %v318
      %v330 = vadd.f32 %v291, %v318
      %v331 = vadd.f32 %v292, %v318
      %v332 = vadd.f32 %v293, %v318
      %v333 = vadd.f32 %v294, %v318
      %v334 = vadd.f32 %v295, %v318
      %v335 = vadd.f32 %v296, %v318
      %v336 = vadd.f32 %v297, %v318
      %v337 = vadd.f32 %v298, %v318
      %v338 = vadd.f32 %v299, %v318
      %v339 = vadd.f32 %v300, %v318
      %v340 = vadd.f32 %v301, %v318
      %v341 = vadd.f32 %v302, %v318
      %v342 = vadd.f32 %v303, %v318
      %v343 = vadd.f32 %v304, %v318
      %v344 = vadd.f32 %v305, %v318
      %v345 = vadd.f32 %v306, %v318
      %v346 = vadd.f32 %v307, %v318
      %v347 = vadd.f32 %v308, %v318
      %v348 = vadd.f32 %v309, %v318
      %v349 = vadd.f32 %v310, %v318
      %v350 = vadd.f32 %v311, %v318
      %v351 = vadd.f32 %v312, %v318
      %v352 = vmax.f32 %v320, 0.0
      %v353 = vmax.f32 %v321, 0.0
      %v354 = vmax.f32 %v322, 0.0
      %v355 = vmax.f32 %v323, 0.0
      %v356 = vmax.f32 %v324, 0.0
      %v357 = vmax.f32 %v325, 0.0
      %v358 = vmax.f32 %v326, 0.0
      %v359 = vmax.f32 %v327, 0.0
      %v360 = vmax.f32 %v328, 0.0
      %v361 = vmax.f32 %v329, 0.0
      %v362 = vmax.f32 %v330, 0.0
      %v363 = vmax.f32 %v331, 0.0
      %v364 = vmax.f32 %v332, 0.0
      %v365 = vmax.f32 %v333, 0.0
      %v366 = vmax.f32 %v334, 0.0
      %v367 = vmax.f32 %v335, 0.0
      %v368 = vmax.f32 %v336, 0.0
      %v369 = vmax.f32 %v337, 0.0
      %v370 = vmax.f32 %v338, 0.0
      %v371 = vmax.f32 %v339, 0.0
      %v372 = vmax.f32 %v340, 0.0
      %v373 = vmax.f32 %v341, 0.0
      %v374 = vmax.f32 %v342, 0.0
      %v375 = vmax.f32 %v343, 0.0
      %v376 = vmax.f32 %v344, 0.0
      %v377 = vmax.f32 %v345, 0.0
      %v378 = vmax.f32 %v346, 0.0
      %v379 = vmax.f32 %v347, 0.0
      %v380 = vmax.f32 %v348, 0.0
      %v381 = vmax.f32 %v349, 0.0
      %v382 = vmax.f32 %v350, 0.0
      %v383 = vmax.f32 %v351, 0.0
      %384 = vxpose.xlu0.b32.start [1/16] %v352, 128
      %385 = vxpose.xlu0.b32.cont [2/16] %v353, 128
      %386 = vxpose.xlu0.b32.cont [3/16] %v354, 128
      %387 = vxpose.xlu0.b32.cont [4/16] %v355, 128
      %388 = vxpose.xlu0.b32.cont [5/16] %v356, 128
      %389 = vxpose.xlu0.b32.cont [6/16] %v357, 128
      %390 = vxpose.xlu0.b32.cont [7/16] %v358, 128
      %391 = vxpose.xlu0.b32.cont [8/16] %v359, 128
      %392 = vxpose.xlu0.b32.cont [9/16] %v360, 128
      %393 = vxpose.xlu0.b32.cont [10/16] %v361, 128
      %394 = vxpose.xlu0.b32.cont [11/16] %v362, 128
      %395 = vxpose.xlu0.b32.cont [12/16] %v363, 128
      %396 = vxpose.xlu0.b32.cont [13/16] %v364, 128
      %397 = vxpose.xlu0.b32.cont [14/16] %v365, 128
      %398 = vxpose.xlu0.b32.cont [15/16] %v366, 128
      %399 = vxpose.xlu0.b32.end [16/16] %v367, 128
      %v400 = vpop.trf.xlu0
      %v401 = vpop.trf.xlu0
      %v402 = vpop.trf.xlu0
      %v403 = vpop.trf.xlu0
      %v404 = vpop.trf.xlu0
      %v405 = vpop.trf.xlu0
      %v406 = vpop.trf.xlu0
      %v407 = vpop.trf.xlu0
      %v408 = vpop.trf.xlu0
      %v409 = vpop.trf.xlu0
      %v410 = vpop.trf.xlu0
      %v411 = vpop.trf.xlu0
      %v412 = vpop.trf.xlu0
      %v413 = vpop.trf.xlu0
      %v414 = vpop.trf.xlu0
      %v415 = vpop.trf.xlu0
      %416 = vxpose.xlu0.b32.start [1/16] %v368, 128
      %417 = vxpose.xlu0.b32.cont [2/16] %v369, 128
      %418 = vxpose.xlu0.b32.cont [3/16] %v370, 128
      %419 = vxpose.xlu0.b32.cont [4/16] %v371, 128
      %420 = vxpose.xlu0.b32.cont [5/16] %v372, 128
      %421 = vxpose.xlu0.b32.cont [6/16] %v373, 128
      %422 = vxpose.xlu0.b32.cont [7/16] %v374, 128
      %423 = vxpose.xlu0.b32.cont [8/16] %v375, 128
      %424 = vxpose.xlu0.b32.cont [9/16] %v376, 128
      %425 = vxpose.xlu0.b32.cont [10/16] %v377, 128
      %426 = vxpose.xlu0.b32.cont [11/16] %v378, 128
      %427 = vxpose.xlu0.b32.cont [12/16] %v379, 128
      %428 = vxpose.xlu0.b32.cont [13/16] %v380, 128
      %429 = vxpose.xlu0.b32.cont [14/16] %v381, 128
      %430 = vxpose.xlu0.b32.cont [15/16] %v382, 128
      %431 = vxpose.xlu0.b32.end [16/16] %v383, 128
      %v432 = vpop.trf.xlu0
      %v433 = vpop.trf.xlu0
      %v434 = vpop.trf.xlu0
      %v435 = vpop.trf.xlu0
      %v436 = vpop.trf.xlu0
      %v437 = vpop.trf.xlu0
      %v438 = vpop.trf.xlu0
      %v439 = vpop.trf.xlu0
      %v440 = vpop.trf.xlu0
      %v441 = vpop.trf.xlu0
      %v442 = vpop.trf.xlu0
      %v443 = vpop.trf.xlu0
      %v444 = vpop.trf.xlu0
      %v445 = vpop.trf.xlu0
      %v446 = vpop.trf.xlu0
      %v447 = vpop.trf.xlu0
      %448 = vst [vmem:[%s208] sm:$0xff] %v400
      %449 = vst [vmem:[%s208 + $0x8] sm:$0xff] %v432
      %s450 = smul.u32 2, %s19
      %p451 = scmp.lt.s32.totalorder %s18, 1
      %s452 = scalar_select %p451, %s18, 1
      %p453 = scmp.lt.s32.totalorder %s450, 1
      %s454 = scalar_select %p453, %s450, 1
      %s455 = smul.addr %s452, 2
      %s456 = sadd.s32 %s454, %s455
      %s457 = smul.addr %s456, 8
      %s458 = scalar_lea.vmem %s3, %s457
      // Predicated region
      $region33: #{conv_norm_relu.3} parent=31 // pred_check
        %p459 = pneg %p116
      $region34: #{conv_norm_relu.3} parent=31 // pred_check_branch
        %461 = sbr.rel (%p459) target = $region36
      $region35: #{conv_norm_relu.3} parent=31 // pred_region
        %s462 = smul.u32 2, %s19
      $region36: #{conv_norm_relu.3} parent=31 // pred_fallthru
        _
    $region32: #{conv_norm_relu.3} parent=5 // pred_fallthru
      _
    %p463 = scmp.le.s32.totalorder 2, %s9
    // Predicated region
    $region37: #{conv_norm_relu.3} parent=5 // pred_check
      %p464 = pneg %p463
    $region38: #{conv_norm_relu.3} parent=5 // pred_check_branch
      %466 = sbr.rel (%p464) target = $region40
    $region39: #{conv_norm_relu.3} parent=5 // pred_region
      %s467 = ssub.s32 %s9, 2
      // Predicated region
      $region41: #{conv_norm_relu.3} parent=39 // pred_check
        %p468 = pneg %p122
      $region42: #{conv_norm_relu.3} parent=39 // pred_check_branch
        %470 = sbr.rel (%p468) target = $region44
      $region43: #{conv_norm_relu.3} parent=39 // pred_region
        %s471 = smul.u32 2, %s21
        %p472 = scmp.lt.s32.totalorder %s20, 1
        %s473 = scalar_select %p472, %s20, 1
        %p474 = scmp.lt.s32.totalorder %s471, 1
        %s475 = scalar_select %p474, %s471, 1
        %s476 = smul.addr %s473, 2
        %s477 = sadd.s32 %s475, %s476
        %s478 = smul.addr %s477, 8
        %s479 = scalar_lea.vmem %s3, %s478
      $region44: #{conv_norm_relu.3} parent=39 // pred_fallthru
        _
    $region40: #{conv_norm_relu.3} parent=5 // pred_fallthru
      _
  $region6: #{conv_norm_relu.3} parent=0 // loop_footer
    %s13 = sadd.s32 1, %s9
  $region7: #{conv_norm_relu.3} parent=0 // loop_footer_branch
    %8 = sbr.rel target = $region3
  $region8: #{conv_norm_relu.3} parent=0 // loop_exit
    _

// kernel: conv_norm_relu.2
$region0: #{conv_norm_relu.2}
  #allocation0 [shape = 'u32[]', space=smem, size = 0x4, offset = 0x4, fixed_abs, tag = 'smem constant byte address 0x4 - core index']
  #allocation1 [shape = 'u32[144,128]{1,0:T(1,128)}', space=vmem, size = 0x12000, scoped, tag = 'internal scratch']
  %s0 = inlined_call_operand.vmem [shape: bf16[2,288,12], index: 0, kind: input, shape index: {}]
  %s1 = inlined_call_operand.vmem [shape: bf16[3,12,128], index: 1, kind: input, shape index: {}]
  %s2 = inlined_call_operand.vmem [shape: bf16[2,256,128], index: 2, kind: output, shape index: {0}]
  %s3 = inlined_call_operand.vmem [shape: f32[2,2,128], index: 3, kind: output, shape index: {1}]
  %4 = xla_tuple %s2, %s3
  %s5 = sld [smem:[#allocation0]]
  $region49: #{conv_norm_relu.2} parent=0
    _
  %s7 = ssub.s32 1, %s5
  %s8 = scalar_select 0, %s7, %s5
  loop: start=0, step=1, limit=4
  $region2: #{conv_norm_relu.2} parent=0 // loop_pre_header
    _
  $region3: #{conv_norm_relu.2} parent=0 // loop_header
    %s10 = sphi 0, %s14
    %p11 = scmp.ge.s32.totalorder %s10, 4
    %s20 = sphi 0, %s22
    %s23 = sphi 0, %s20
    %s24 = sphi 0, %s23
    %s40 = sphi 0, %s24
    %s44 = sphi 0, %s44
    %s46 = sphi 0, %s44
    %s47 = sphi 0, %s46
    %s61 = sphi 0, %s47
    %s67 = sphi 0, %s69
    %s70 = sphi 0, %s67
    %s71 = sphi 0, %s70
    %s87 = sphi 0, %s71
    %s93 = sphi 0, %s95
    %s96 = sphi 0, %s93
    %s97 = sphi 0, %s96
    %s113 = sphi 0, %s97
  $region4: #{conv_norm_relu.2} parent=0 // loop_header_branch
    %13 = sbr.rel (%p11) target = $region8
  $region5: #{conv_norm_relu.2} parent=0 // loop_body
    %s15 = ssub.s32 %s10, 1
    %s16 = ssub.s32 %s10, 2
    %s17 = sadd.s32 %s10, 1
    %s18 = ssub.s32 %s10, %s17
    %p19 = scmp.eq.s32.totalorder %s18, 0
    %s21 = sadd.s32 %s20, 1
    %s22 = scalar_select %p19, %s20, %s21
    %p25 = pneg %p19
    %p26 = scmp.eq.s32.totalorder %s10, 1
    %p27 = por %p25, %p26
    %p28 = scmp.ne.s32.totalorder %s20, %s23
    %p29 = scmp.eq.s32.totalorder %s10, 0
    %p30 = por %p28, %p29
    %p31 = scmp.ne.s32.totalorder %s20, %s23
    %p32 = scmp.eq.s32.totalorder %s15, 1
    %p33 = por %p31, %p32
    %p34 = scmp.ne.s32.totalorder %s23, %s24
    %p35 = scmp.eq.s32.totalorder %s15, 0
    %p36 = por %p34, %p35
    %p37 = scmp.ne.s32.totalorder %s23, %s24
    %p38 = scmp.eq.s32.totalorder %s16, 1
    %p39 = por %p37, %p38
    %p41 = scmp.ne.s32.totalorder %s24, %s40
    %p42 = scmp.eq.s32.totalorder %s16, 0
    %p43 = por %p41, %p42
    %s45 = sadd.s32 %s44, 1
    %p48 = scmp.eq.s32.totalorder %s10, 1
    %p49 = scmp.ne.s32.totalorder %s44, %s46
    %p50 = scmp.eq.s32.totalorder %s10, 0
    %p51 = por %p49, %p50
    %p52 = scmp.ne.s32.totalorder %s44, %s46
    %p53 = scmp.eq.s32.totalorder %s15, 1
    %p54 = por %p52, %p53
    %p55 = scmp.ne.s32.totalorder %s46, %s47
    %p56 = scmp.eq.s32.totalorder %s15, 0
    %p57 = por %p55, %p56
    %p58 = scmp.ne.s32.totalorder %s46, %s47
    %p59 = scmp.eq.s32.totalorder %s16, 1
    %p60 = por %p58, %p59
    %p62 = scmp.ne.s32.totalorder %s47, %s61
    %p63 = scmp.eq.s32.totalorder %s16, 0
    %p64 = por %p62, %p63
    %s65 = ssub.s32 %s10, %s17
    %p66 = scmp.eq.s32.totalorder %s65, 0
    %s68 = sadd.s32 %s67, 1
    %s69 = scalar_select %p66, %s67, %s68
    %p72 = pneg %p66
    %p73 = scmp.eq.s32.totalorder %s10, 1
    %p74 = por %p72, %p73
    %p75 = scmp.ne.s32.totalorder %s67, %s70
    %p76 = scmp.eq.s32.totalorder %s10, 0
    %p77 = por %p75, %p76
    %p78 = scmp.ne.s32.totalorder %s67, %s70
    %p79 = scmp.eq.s32.totalorder %s15, 1
    %p80 = por %p78, %p79
    %p81 = scmp.ne.s32.totalorder %s70, %s71
    %p82 = scmp.eq.s32.totalorder %s15, 0
    %p83 = por %p81, %p82
    %p84 = scmp.ne.s32.totalorder %s70, %s71
    %p85 = scmp.eq.s32.totalorder %s16, 1
    %p86 = por %p84, %p85
    %p88 = scmp.ne.s32.totalorder %s71, %s87
    %p89 = scmp.eq.s32.totalorder %s16, 0
    %p90 = por %p88, %p89
    %s91 = ssub.s32 %s10, %s17
    %p92 = scmp.eq.s32.totalorder %s91, 0
    %s94 = sadd.s32 %s93, 1
    %s95 = scalar_select %p92, %s93, %s94
    %p98 = pneg %p92
    %p99 = scmp.eq.s32.totalorder %s10, 1
    %p100 = por %p98, %p99
    %p101 = scmp.ne.s32.totalorder %s93, %s96
    %p102 = scmp.eq.s32.totalorder %s10, 0
    %p103 = por %p101, %p102
    %p104 = scmp.ne.s32.totalorder %s93, %s96
    %p105 = scmp.eq.s32.totalorder %s15, 1
    %p106 = por %p104, %p105
    %p107 = scmp.ne.s32.totalorder %s96, %s97
    %p108 = scmp.eq.s32.totalorder %s15, 0
    %p109 = por %p107, %p108
    %p110 = scmp.ne.s32.totalorder %s96, %s97
    %p111 = scmp.eq.s32.totalorder %s16, 1
    %p112 = por %p110, %p111
    %p114 = scmp.ne.s32.totalorder %s97, %s113
    %p115 = scmp.eq.s32.totalorder %s16, 0
    %p116 = por %p114, %p115
    %p117 = scmp.le.s32.totalorder 1, %s10
    %p118 = scmp.lt.s32.totalorder %s10, 3
    %p119 = pnand %p117, %p118
    %p120 = pneg %p119
    // Predicated region
    $region9: #{conv_norm_relu.2} parent=5 // pred_check
      _
    $region10: #{conv_norm_relu.2} parent=5 // pred_check_branch
      %122 = sbr.rel (%p119) target = $region12
    $region11: #{conv_norm_relu.2} parent=5 // pred_region
      %s123 = ssub.s32 %s10, 1
      // Predicated region
      $region13: #{conv_norm_relu.2} parent=11 // pred_check
        %p124 = pneg %p57
      $region14: #{conv_norm_relu.2} parent=11 // pred_check_branch
        %126 = sbr.rel (%p124) target = $region16
      $region15: #{conv_norm_relu.2} parent=11 // pred_region
        _
      $region16: #{conv_norm_relu.2} parent=11 // pred_fallthru
        _
    $region12: #{conv_norm_relu.2} parent=5 // pred_fallthru
      _
    %p127 = scmp.lt.s32.totalorder %s10, 2
    // Predicated region
    $region17: #{conv_norm_relu.2} parent=5 // pred_check
      %p128 = pneg %p127
    $region18: #{conv_norm_relu.2} parent=5 // pred_check_branch
      %130 = sbr.rel (%p128) target = $region20
    $region19: #{conv_norm_relu.2} parent=5 // pred_region
      // Predicated region
      $region21: #{conv_norm_relu.2} parent=19 // pred_check
        %p131 = pneg %p30
      $region22: #{conv_norm_relu.2} parent=19 // pred_check_branch
        %133 = sbr.rel (%p131) target = $region24
      $region23: #{conv_norm_relu.2} parent=19 // pred_region
        %p134 = scmp.lt.s32.totalorder %s10, 1
        %s135 = scalar_select %p134, %s10, 1
        %s136 = smul.addr %s135, 36
        %s137 = smul.addr %s136, 4
        %s138 = scalar_lea.vmem %s0, %s137
      $region24: #{conv_norm_relu.2} parent=19 // pred_fallthru
        _
    $region20: #{conv_norm_relu.2} parent=5 // pred_fallthru
      _
    %p139 = scmp.le.s32.totalorder 1, %s10
    %p140 = scmp.lt.s32.totalorder %s10, 3
    %p141 = pnand %p139, %p140
    %p142 = pneg %p141
    // Predicated region
    $region25: #{conv_norm_relu.2} parent=5 // pred_check
      _
    $region26: #{conv_norm_relu.2} parent=5 // pred_check_branch
      %144 = sbr.rel (%p141) target = $region28
    $region27: #{conv_norm_relu.2} parent=5 // pred_region
      %s145 = ssub.s32 %s10, 1
      %p146 = scmp.lt.s32.totalorder %s15, 1
      %s147 = scalar_select %p146, %s15, 1
      %s148 = smul.addr %s147, 36
      %s149 = smul.addr %s148, 4
      %s150 = scalar_lea.vmem %s0, %s149
      %p151 = pneg %p36
      %p152 = pneg %p33
      %p153 = pneg %p57
      %p154 = pneg %p54
      %p155 = pneg %p83
      %p156 = pneg %p80
      %p157 = scmp.lt.s32.totalorder %s15, 1
      %s158 = scalar_select %p157, %s15, 1
      %s159 = smul.addr %s158, 32
      %s160 = smul.addr %s159, 4
      %s161 = scalar_lea.vmem %s2, %s160
      %p162 = pneg %p109
      %p163 = pneg %p106
      %p164 = scmp.lt.s32.totalorder %s15, 1
      %s165 = scalar_select %p164, %s15, 1
      %s166 = smul.addr %s165, 2
      %s167 = scalar_lea.vmem %s3, %s166
      %p168 = scmp.lt.s32.totalorder %s15, 1
      %s169 = scalar_select %p168, %s15, 1
      %s170 = smul.addr %s169, 36
      %s171 = smul.addr %s170, 4
      %s172 = scalar_lea.vmem %s0, %s171
      %p173 = scmp.lt.s32.totalorder %s15, 1
      %s174 = scalar_select %p173, %s15, 1
      %s175 = smul.addr %s174, 32
      %s176 = smul.addr %s175, 4
      %s177 = scalar_lea.vmem %s2, %s176
      %p178 = scmp.lt.s32.totalorder %s15, 1
      %s179 = scalar_select %p178, %s15, 1
      %s180 = smul.addr %s179, 2
      %s181 = scalar_lea.vmem %s3, %s180
      %v183 = vld [vmem:[%s172] sm:$0xf]
      %v184 = vld [vmem:[%s172 + $0x4] sm:$0xf]
      %v185 = vld [vmem:[%s172 + $0x8] sm:$0xf]
      %v186 = vld [vmem:[%s172 + $0xc] sm:$0xf]
      %v187 = vld [vmem:[%s172 + $0x10] sm:$0xf]
      %v188 = vld [vmem:[%s172 + $0x14] sm:$0xf]
      %v189 = vld [vmem:[%s172 + $0x18] sm:$0xf]
      %v190 = vld [vmem:[%s172 + $0x1c] sm:$0xf]
      %v191 = vld [vmem:[%s172 + $0x20] sm:$0xf]
      %v192 = vld [vmem:[%s172 + $0x24] sm:$0xf]
      %v193 = vld [vmem:[%s172 + $0x28] sm:$0xf]
      %v194 = vld [vmem:[%s172 + $0x2c] sm:$0xf]
      %v195 = vld [vmem:[%s172 + $0x30] sm:$0xf]
      %v196 = vld [vmem:[%s172 + $0x34] sm:$0xf]
      %v197 = vld [vmem:[%s172 + $0x38] sm:$0xf]
      %v198 = vld [vmem:[%s172 + $0x3c] sm:$0xf]
      %v199 = vld [vmem:[%s172 + $0x40] sm:$0xf]
      %v200 = vld [vmem:[%s172 + $0x44] sm:$0xf]
      %v201 = vld [vmem:[%s172 + $0x48] sm:$0xf]
      %v202 = vld [vmem:[%s172 + $0x4c] sm:$0xf]
      %v203 = vld [vmem:[%s172 + $0x50] sm:$0xf]
      %v204 = vld [vmem:[%s172 + $0x54] sm:$0xf]
      %v205 = vld [vmem:[%s172 + $0x58] sm:$0xf]
      %v206 = vld [vmem:[%s172 + $0x5c] sm:$0xf]
      %v207 = vld [vmem:[%s172 + $0x60] sm:$0xf]
      %v208 = vld [vmem:[%s172 + $0x64] sm:$0xf]
      %v209 = vld [vmem:[%s172 + $0x68] sm:$0xf]
      %v210 = vld [vmem:[%s172 + $0x6c] sm:$0xf]
      %v211 = vld [vmem:[%s172 + $0x70] sm:$0xf]
      %v212 = vld [vmem:[%s172 + $0x74] sm:$0xf]
      %v213 = vld [vmem:[%s172 + $0x78] sm:$0xf]
      %v214 = vld [vmem:[%s172 + $0x7c] sm:$0xf]
      %v215 = vld [vmem:[%s1] sm:$0xf]
      %v216 = vld [vmem:[%s1 + $0x4] sm:$0x3]
      %v217 = vld [vmem:[%s172 + $0x80] sm:$0xf]
      %v218 = vld [vmem:[%s172 + $0x84] sm:$0xf]
      %s219 = scalar_lea.vmem %s1, 8
      %v220 = vld [vmem:[%s219] sm:$0xf]
      %v221 = vld [vmem:[%s219 + $0x4] sm:$0x3]
      %v254 = vunpack.c.l.b16 %v185
      %v255 = vunpack.c.l.b16 %v186
      %v256 = vunpack.c.l.b16 %v187
      %v257 = vunpack.c.l.b16 %v188
      %v258 = vunpack.c.l.b16 %v189
      %v259 = vunpack.c.l.b16 %v190
      %v260 = vunpack.c.l.b16 %v191
      %v261 = vunpack.c.l.b16 %v192
      %v262 = vunpack.c.l.b16 %v193
      %v263 = vunpack.c.l.b16 %v194
      %v264 = vunpack.c.l.b16 %v195
      %v265 = vunpack.c.l.b16 %v196
      %v266 = vunpack.c.l.b16 %v197
      %v267 = vunpack.c.l.b16 %v198
      %v268 = vunpack.c.l.b16 %v199
      %v269 = vunpack.c.l.b16 %v200
      %v270 = vunpack.c.l.b16 %v201
      %v271 = vunpack.c.l.b16 %v202
      %v272 = vunpack.c.l.b16 %v203
      %v273 = vunpack.c.l.b16 %v204
      %v274 = vunpack.c.l.b16 %v205
      %v275 = vunpack.c.l.b16 %v206
      %v276 = vunpack.c.l.b16 %v207
      %v277 = vunpack.c.l.b16 %v208
      %v278 = vunpack.c.l.b16 %v209
      %v279 = vunpack.c.l.b16 %v210
      %v280 = vunpack.c.l.b16 %v211
      %v281 = vunpack.c.l.b16 %v212
      %v282 = vunpack.c.l.b16 %v213
      %v283 = vunpack.c.l.b16 %v214
      %v284 = vunpack.c.l.b16 %v217
      %v285 = vunpack.c.l.b16 %v218
      %v286 = vpack.c.b16 %v255, %v254
      %v287 = vpack.c.b16 %v257, %v256
      %v288 = vpack.c.b16 %v259, %v258
      %v289 = vpack.c.b16 %v261, %v260
      %v290 = vpack.c.b16 %v263, %v262
      %v291 = vpack.c.b16 %v265, %v264
      %v292 = vpack.c.b16 %v267, %v266
      %v293 = vpack.c.b16 %v269, %v268
      %v294 = vpack.c.b16 %v271, %v270
      %v295 = vpack.c.b16 %v273, %v272
      %v296 = vpack.c.b16 %v275, %v274
      %v297 = vpack.c.b16 %v277, %v276
      %v298 = vpack.c.b16 %v279, %v278
      %v299 = vpack.c.b16 %v281, %v280
      %v300 = vpack.c.b16 %v283, %v282
      %v301 = vpack.c.b16 %v285, %v284
      %v304 = vunpack.c.l.b16 %v220
      %v305 = vunpack.c.l.b16 %v221
      %v306 = vpack.c.b16 %v305, %v304
      %vm307 = vcmask 97280
      %v309 = vsel %vm307, %v286, 0
      %v312 = vsel %vm307, %v287, 0
      %v315 = vsel %vm307, %v288, 0
      %v318 = vsel %vm307, %v289, 0
      %v321 = vsel %vm307, %v290, 0
      %v324 = vsel %vm307, %v291, 0
      %v327 = vsel %vm307, %v292, 0
      %v330 = vsel %vm307, %v293, 0
      %v333 = vsel %vm307, %v294, 0
      %v336 = vsel %vm307, %v295, 0
      %v339 = vsel %vm307, %v296, 0
      %v342 = vsel %vm307, %v297, 0
      %v345 = vsel %vm307, %v298, 0
      %v348 = vsel %vm307, %v299, 0
      %v351 = vsel %vm307, %v300, 0
      %v354 = vsel %vm307, %v301, 0
      %vm356 = vcmask 1045504
      %v358 = vsel %vm356, %v306, 0
      %360 = vmatprep.subr.bf16.mxu0 0
      %361 = vmatpush1.bf16.msra.mxu0 %v358
      %362 = vmatprep.subr.bf16.mxu0 0
      %363 = vmatpush1.bf16.msra.mxu0 0
      %364 = vmatprep.subr.bf16.mxu0 0
      %365 = vmatpush1.bf16.msra.mxu0 0
      %366 = vmatprep.subr.bf16.mxu0 0
      %367 = vmatpush1.bf16.msra.mxu0 0
      %368 = vmatprep.subr.bf16.mxu0 0
      %369 = vmatpush1.bf16.msra.mxu0 0
      %370 = vmatprep.subr.bf16.mxu0 0
      %371 = vmatpush1.bf16.msra.mxu0 0
      %372 = vmatprep.subr.bf16.mxu0 0
      %373 = vmatpush1.bf16.msra.mxu0 0
      %374 = vmatprep.subr.bf16.mxu0 0
      %375 = vmatpush1.bf16.msra.mxu0 0
      %376 = vmatprep.subr.bf16.mxu0 0
      %377 = vmatpush1.bf16.msra.mxu0 0
      %378 = vmatprep.subr.bf16.mxu0 0
      %379 = vmatpush1.bf16.msra.mxu0 0
      %380 = vmatprep.subr.bf16.mxu0 0
      %381 = vmatpush1.bf16.msra.mxu0 0
      %382 = vmatprep.subr.bf16.mxu0 0
      %383 = vmatpush1.bf16.msra.mxu0 0
      %384 = vmatprep.subr.bf16.mxu0 0
      %385 = vmatpush1.bf16.msra.mxu0 0
      %386 = vmatprep.subr.bf16.mxu0 0
      %387 = vmatpush1.bf16.msra.mxu0 0
      %388 = vmatprep.subr.bf16.mxu0 0
      %389 = vmatpush1.bf16.msra.mxu0 0
      %390 = vmatprep.subr.bf16.mxu0 0
      %391 = vmatpush1.bf16.msra.mxu0 0
      %392 = vmatprep.mubr.bf16.mxu0 0
      %393 = vmatmul.mubr.bf16.gmra.mrb[0].mxu0 %v309
      %v394 = vpop.f32.mrb[0].mxu0
      %v395 = vadd.f32 0.0, %v394
      %v396 = vpop.f32.mrb[0].mxu0
      %v397 = vpop.f32.mrb[0].mxu0
      %v398 = vadd.f32 0.0, %v397
      %v399 = vpop.f32.mrb[0].mxu0
      %400 = vmatprep.mubr.bf16.mxu0 0
      %401 = vmatmul.mubr.bf16.gmra.mrb[0].mxu0 %v312
      %v402 = vpop.f32.mrb[0].mxu0
      %v403 = vadd.f32 0.0, %v402
      %v404 = vpop.f32.mrb[0].mxu0
      %v405 = vpop.f32.mrb[0].mxu0
      %v406 = vadd.f32 0.0, %v405
      %v407 = vpop.f32.mrb[0].mxu0
      %408 = vmatprep.mubr.bf16.mxu0 0
      %409 = vmatmul.mubr.bf16.gmra.mrb[0].mxu0 %v315
      %v410 = vpop.f32.mrb[0].mxu0
      %v411 = vadd.f32 0.0, %v410
      %v412 = vpop.f32.mrb[0].mxu0
      %v413 = vpop.f32.mrb[0].mxu0
      %v414 = vadd.f32 0.0, %v413
      %v415 = vpop.f32.mrb[0].mxu0
      %416 = vmatprep.mubr.bf16.mxu0 0
      %417 = vmatmul.mubr.bf16.gmra.mrb[0].mxu0 %v318
      %v418 = vpop.f32.mrb[0].mxu0
      %v419 = vadd.f32 0.0, %v418
      %v420 = vpop.f32.mrb[0].mxu0
      %v421 = vpop.f32.mrb[0].mxu0
      %v422 = vadd.f32 0.0, %v421
      %v423 = vpop.f32.mrb[0].mxu0
      %424 = vmatprep.mubr.bf16.mxu0 0
      %425 = vmatmul.mubr.bf16.gmra.mrb[0].mxu0 %v321
      %v426 = vpop.f32.mrb[0].mxu0
      %v427 = vadd.f32 0.0, %v426
      %v428 = vpop.f32.mrb[0].mxu0
      %v429 = vpop.f32.mrb[0].mxu0
      %v430 = vadd.f32 0.0, %v429
      %v431 = vpop.f32.mrb[0].mxu0
      %432 = vmatprep.mubr.bf16.mxu0 0
      %433 = vmatmul.mubr.bf16.gmra.mrb[0].mxu0 %v324
      %v434 = vpop.f32.mrb[0].mxu0
      %v435 = vadd.f32 0.0, %v434
      %v436 = vpop.f32.mrb[0].mxu0
      %v437 = vpop.f32.mrb[0].mxu0
      %v438 = vadd.f32 0.0, %v437
      %v439 = vpop.f32.mrb[0].mxu0
      %440 = vmatprep.mubr.bf16.mxu0 0
      %441 = vmatmul.mubr.bf16.gmra.mrb[0].mxu0 %v327
      %v442 = vpop.f32.mrb[0].mxu0
      %v443 = vadd.f32 0.0, %v442
      %v444 = vpop.f32.mrb[0].mxu0
      %v445 = vpop.f32.mrb[0].mxu0
      %v446 = vadd.f32 0.0, %v445
      %v447 = vpop.f32.mrb[0].mxu0
      %448 = vmatprep.mubr.bf16.mxu0 0
      %449 = vmatmul.mubr.bf16.gmra.mrb[0].mxu0 %v330
      %v450 = vpop.f32.mrb[0].mxu0
      %v451 = vadd.f32 0.0, %v450
      %v452 = vpop.f32.mrb[0].mxu0
      %v453 = vpop.f32.mrb[0].mxu0
      %v454 = vadd.f32 0.0, %v453
      %v455 = vpop.f32.mrb[0].mxu0
      %456 = vmatprep.mubr.bf16.mxu0 0
      %457 = vmatmul.mubr.bf16.gmra.mrb[0].mxu0 %v333
      %v458 = vpop.f32.mrb[0].mxu0
      %v459 = vadd.f32 0.0, %v458
      %v460 = vpop.f32.mrb[0].mxu0
      %v461 = vpop.f32.mrb[0].mxu0
      %v462 = vadd.f32 0.0, %v461
      %v463 = vpop.f32.mrb[0].mxu0
      %464 = vmatprep.mubr.bf16.mxu0 0
      %465 = vmatmul.mubr.bf16.gmra.mrb[0].mxu0 %v336
      %v466 = vpop.f32.mrb[0].mxu0
      %v467 = vadd.f32 0.0, %v466
      %v468 = vpop.f32.mrb[0].mxu0
      %v469 = vpop.f32.mrb[0].mxu0
      %v470 = vadd.f32 0.0, %v469
      %v471 = vpop.f32.mrb[0].mxu0
      %472 = vmatprep.mubr.bf16.mxu0 0
      %473 = vmatmul.mubr.bf16.gmra.mrb[0].mxu0 %v339
      %v474 = vpop.f32.mrb[0].mxu0
      %v475 = vadd.f32 0.0, %v474
      %v476 = vpop.f32.mrb[0].mxu0
      %v477 = vpop.f32.mrb[0].mxu0
      %v478 = vadd.f32 0.0, %v477
      %v479 = vpop.f32.mrb[0].mxu0
      %480 = vmatprep.mubr.bf16.mxu0 0
      %481 = vmatmul.mubr.bf16.gmra.mrb[0].mxu0 %v342
      %v482 = vpop.f32.mrb[0].mxu0
      %v483 = vadd.f32 0.0, %v482
      %v484 = vpop.f32.mrb[0].mxu0
      %v485 = vpop.f32.mrb[0].mxu0
      %v486 = vadd.f32 0.0, %v485
      %v487 = vpop.f32.mrb[0].mxu0
      %488 = vmatprep.mubr.bf16.mxu0 0
      %489 = vmatmul.mubr.bf16.gmra.mrb[0].mxu0 %v345
      %v490 = vpop.f32.mrb[0].mxu0
      %v491 = vadd.f32 0.0, %v490
      %v492 = vpop.f32.mrb[0].mxu0
      %v493 = vpop.f32.mrb[0].mxu0
      %v494 = vadd.f32 0.0, %v493
      %v495 = vpop.f32.mrb[0].mxu0
      %496 = vmatprep.mubr.bf16.mxu0 0
      %497 = vmatmul.mubr.bf16.gmra.mrb[0].mxu0 %v348
      %v498 = vpop.f32.mrb[0].mxu0
      %v499 = vadd.f32 0.0, %v498
      %v500 = vpop.f32.mrb[0].mxu0
      %v501 = vpop.f32.mrb[0].mxu0
      %v502 = vadd.f32 0.0, %v501
      %v503 = vpop.f32.mrb[0].mxu0
      %504 = vmatprep.mubr.bf16.mxu0 0
      %505 = vmatmul.mubr.bf16.gmra.mrb[0].mxu0 %v351
      %v506 = vpop.f32.mrb[0].mxu0
      %v507 = vadd.f32 0.0, %v506
      %v508 = vpop.f32.mrb[0].mxu0
      %v509 = vpop.f32.mrb[0].mxu0
      %v510 = vadd.f32 0.0, %v509
      %v511 = vpop.f32.mrb[0].mxu0
      %512 = vmatprep.mubr.bf16.mxu0 0
      %513 = vmatmul.mubr.bf16.gmra.mrb[0].mxu0 %v354
      %v514 = vpop.f32.mrb[0].mxu0
      %v515 = vadd.f32 0.0, %v514
      %v516 = vpop.f32.mrb[0].mxu0
      %v517 = vpop.f32.mrb[0].mxu0
      %v518 = vadd.f32 0.0, %v517
      %v519 = vpop.f32.mrb[0].mxu0
      %520 = vdwg.mxu0
      %v523 = vunpack.c.l.b16 %v183
      %v524 = vunpack.c.l.b16 %v184
      %v525 = vpack.c.b16 %v524, %v523
      %v528 = vunpack.c.l.b16 %v215
      %v529 = vunpack.c.l.b16 %v216
      %v530 = vpack.c.b16 %v529, %v528
      %v532 = vsel %vm307, %v525, 0
      %v535 = vsel %vm356, %v530, 0
      %537 = vmatprep.subr.bf16.mxu0 0
      %538 = vmatpush1.bf16.msra.mxu0 %v535
      %539 = vmatprep.subr.bf16.mxu0 0
      %540 = vmatpush1.bf16.msra.mxu0 0
      %541 = vmatprep.subr.bf16.mxu0 0
      %542 = vmatpush1.bf16.msra.mxu0 0
      %543 = vmatprep.subr.bf16.mxu0 0
      %544 = vmatpush1.bf16.msra.mxu0 0
      %545 = vmatprep.subr.bf16.mxu0 0
      %546 = vmatpush1.bf16.msra.mxu0 0
      %547 = vmatprep.subr.bf16.mxu0 0
      %548 = vmatpush1.bf16.msra.mxu0 0
      %549 = vmatprep.subr.bf16.mxu0 0
      %550 = vmatpush1.bf16.msra.mxu0 0
      %551 = vmatprep.subr.bf16.mxu0 0
      %552 = vmatpush1.bf16.msra.mxu0 0
      %553 = vmatprep.subr.bf16.mxu0 0
      %554 = vmatpush1.bf16.msra.mxu0 0
      %555 = vmatprep.subr.bf16.mxu0 0
      %556 = vmatpush1.bf16.msra.mxu0 0
      %557 = vmatprep.subr.bf16.mxu0 0
      %558 = vmatpush1.bf16.msra.mxu0 0
      %559 = vmatprep.subr.bf16.mxu0 0
      %560 = vmatpush1.bf16.msra.mxu0 0
      %561 = vmatprep.subr.bf16.mxu0 0
      %562 = vmatpush1.bf16.msra.mxu0 0
      %563 = vmatprep.subr.bf16.mxu0 0
      %564 = vmatpush1.bf16.msra.mxu0 0
      %565 = vmatprep.subr.bf16.mxu0 0
      %566 = vmatpush1.bf16.msra.mxu0 0
      %567 = vmatprep.subr.bf16.mxu0 0
      %568 = vmatpush1.bf16.msra.mxu0 0
      %569 = vmatprep.mubr.bf16.mxu0 0
      %570 = vmatmul.mubr.bf16.gmra.mrb[0].mxu0 %v532
      %v571 = vpop.f32.mrb[0].mxu0
      %v572 = vadd.f32 %v395, %v571
      %v573 = vpop.f32.mrb[0].mxu0
      %v574 = vpop.f32.mrb[0].mxu0
      %v575 = vadd.f32 %v398, %v574
      %v576 = vpop.f32.mrb[0].mxu0
      %577 = vmatprep.mubr.bf16.mxu0 0
      %578 = vmatmul.mubr.bf16.gmra.mrb[0].mxu0 %v309
      %v579 = vpop.f32.mrb[0].mxu0
      %v580 = vadd.f32 %v403, %v579
      %v581 = vpop.f32.mrb[0].mxu0
      %v582 = vpop.f32.mrb[0].mxu0
      %v583 = vadd.f32 %v406, %v582
      %v584 = vpop.f32.mrb[0].mxu0
      %585 = vmatprep.mubr.bf16.mxu0 0
      %586 = vmatmul.mubr.bf16.gmra.mrb[0].mxu0 %v312
      %v587 = vpop.f32.mrb[0].mxu0
      %v588 = vadd.f32 %v411, %v587
      %v589 = vpop.f32.mrb[0].mxu0
      %v590 = vpop.f32.mrb[0].mxu0
      %v591 = vadd.f32 %v414, %v590
      %v592 = vpop.f32.mrb[0].mxu0
      %593 = vmatprep.mubr.bf16.mxu0 0
      %594 = vmatmul.mubr.bf16.gmra.mrb[0].mxu0 %v315
      %v595 = vpop.f32.mrb[0].mxu0
      %v596 = vadd.f32 %v419, %v595
      %v597 = vpop.f32.mrb[0].mxu0
      %v598 = vpop.f32.mrb[0].mxu0
      %v599 = vadd.f32 %v422, %v598
      %v600 = vpop.f32.mrb[0].mxu0
      %601 = vmatprep.mubr.bf16.mxu0 0
      %602 = vmatmul.mubr.bf16.gmra.mrb[0].mxu0 %v318
      %v603 = vpop.f32.mrb[0].mxu0
      %v604 = vadd.f32 %v427, %v603
      %v605 = vpop.f32.mrb[0].mxu0
      %v606 = vpop.f32.mrb[0].mxu0
      %v607 = vadd.f32 %v430, %v606
      %v608 = vpop.f32.mrb[0].mxu0
      %609 = vmatprep.mubr.bf16.mxu0 0
      %610 = vmatmul.mubr.bf16.gmra.mrb[0].mxu0 %v321
      %v611 = vpop.f32.mrb[0].mxu0
      %v612 = vadd.f32 %v435, %v611
      %v613 = vpop.f32.mrb[0].mxu0
      %v614 = vpop.f32.mrb[0].mxu0
      %v615 = vadd.f32 %v438, %v614
      %v616 = vpop.f32.mrb[0].mxu0
      %617 = vmatprep.mubr.bf16.mxu0 0
      %618 = vmatmul.mubr.bf16.gmra.mrb[0].mxu0 %v324
      %v619 = vpop.f32.mrb[0].mxu0
      %v620 = vadd.f32 %v443, %v619
      %v621 = vpop.f32.mrb[0].mxu0
      %v622 = vpop.f32.mrb[0].mxu0
      %v623 = vadd.f32 %v446, %v622
      %v624 = vpop.f32.mrb[0].mxu0
      %625 = vmatprep.mubr.bf16.mxu0 0
      %626 = vmatmul.mubr.bf16.gmra.mrb[0].mxu0 %v327
      %v627 = vpop.f32.mrb[0].mxu0
      %v628 = vadd.f32 %v451, %v627
      %v629 = vpop.f32.mrb[0].mxu0
      %v630 = vpop.f32.mrb[0].mxu0
      %v631 = vadd.f32 %v454, %v630
      %v632 = vpop.f32.mrb[0].mxu0
      %633 = vmatprep.mubr.bf16.mxu0 0
      %634 = vmatmul.mubr.bf16.gmra.mrb[0].mxu0 %v330
      %v635 = vpop.f32.mrb[0].mxu0
      %v636 = vadd.f32 %v459, %v635
      %v637 = vpop.f32.mrb[0].mxu0
      %v638 = vpop.f32.mrb[0].mxu0
      %v639 = vadd.f32 %v462, %v638
      %v640 = vpop.f32.mrb[0].mxu0
      %641 = vmatprep.mubr.bf16.mxu0 0
      %642 = vmatmul.mubr.bf16.gmra.mrb[0].mxu0 %v333
      %v643 = vpop.f32.mrb[0].mxu0
      %v644 = vadd.f32 %v467, %v643
      %v645 = vpop.f32.mrb[0].mxu0
      %v646 = vpop.f32.mrb[0].mxu0
      %v647 = vadd.f32 %v470, %v646
      %v648 = vpop.f32.mrb[0].mxu0
      %649 = vmatprep.mubr.bf16.mxu0 0
      %650 = vmatmul.mubr.bf16.gmra.mrb[0].mxu0 %v336
      %v651 = vpop.f32.mrb[0].mxu0
      %v652 = vadd.f32 %v475, %v651
      %v653 = vpop.f32.mrb[0].mxu0
      %v654 = vpop.f32.mrb[0].mxu0
      %v655 = vadd.f32 %v478, %v654
      %v656 = vpop.f32.mrb[0].mxu0
      %657 = vmatprep.mubr.bf16.mxu0 0
      %658 = vmatmul.mubr.bf16.gmra.mrb[0].mxu0 %v339
      %v659 = vpop.f32.mrb[0].mxu0
      %v660 = vadd.f32 %v483, %v659
      %v661 = vpop.f32.mrb[0].mxu0
      %v662 = vpop.f32.mrb[0].mxu0
      %v663 = vadd.f32 %v486, %v662
      %v664 = vpop.f32.mrb[0].mxu0
      %665 = vmatprep.mubr.bf16.mxu0 0
      %666 = vmatmul.mubr.bf16.gmra.mrb[0].mxu0 %v342
      %v667 = vpop.f32.mrb[0].mxu0
      %v668 = vadd.f32 %v491, %v667
      %v669 = vpop.f32.mrb[0].mxu0
      %v670 = vpop.f32.mrb[0].mxu0
      %v671 = vadd.f32 %v494, %v670
      %v672 = vpop.f32.mrb[0].mxu0
      %673 = vmatprep.mubr.bf16.mxu0 0
      %674 = vmatmul.mubr.bf16.gmra.mrb[0].mxu0 %v345
      %v675 = vpop.f32.mrb[0].mxu0
      %v676 = vadd.f32 %v499, %v675
      %v677 = vpop.f32.mrb[0].mxu0
      %v678 = vpop.f32.mrb[0].mxu0
      %v679 = vadd.f32 %v502, %v678
      %v680 = vpop.f32.mrb[0].mxu0
      %681 = vmatprep.mubr.bf16.mxu0 0
      %682 = vmatmul.mubr.bf16.gmra.mrb[0].mxu0 %v348
      %v683 = vpop.f32.mrb[0].mxu0
      %v684 = vadd.f32 %v507, %v683
      %v685 = vpop.f32.mrb[0].mxu0
      %v686 = vpop.f32.mrb[0].mxu0
      %v687 = vadd.f32 %v510, %v686
      %v688 = vpop.f32.mrb[0].mxu0
      %689 = vmatprep.mubr.bf16.mxu0 0
      %690 = vmatmul.mubr.bf16.gmra.mrb[0].mxu0 %v351
      %v691 = vpop.f32.mrb[0].mxu0
      %v692 = vadd.f32 %v515, %v691
      %v693 = vpop.f32.mrb[0].mxu0
      %v694 = vpop.f32.mrb[0].mxu0
      %v695 = vadd.f32 %v518, %v694
      %v696 = vpop.f32.mrb[0].mxu0
      %697 = vdwg.mxu0
      %v698 = vld [vmem:[%s172 + $0x10] sm:$0xf]
      %v699 = vld [vmem:[%s172 + $0x14] sm:$0xf]
      %v700 = vld [vmem:[%s172 + $0x18] sm:$0xf]
      %v701 = vld [vmem:[%s172 + $0x1c] sm:$0xf]
      %v702 = vld [vmem:[%s172 + $0x20] sm:$0xf]
      %v703 = vld [vmem:[%s172 + $0x24] sm:$0xf]
      %v704 = vld [vmem:[%s172 + $0x28] sm:$0xf]
      %v705 = vld [vmem:[%s172 + $0x2c] sm:$0xf]
      %v706 = vld [vmem:[%s172 + $0x30] sm:$0xf]
      %v707 = vld [vmem:[%s172 + $0x34] sm:$0xf]
      %v708 = vld [vmem:[%s172 + $0x38] sm:$0xf]
      %v709 = vld [vmem:[%s172 + $0x3c] sm:$0xf]
      %v710 = vld [vmem:[%s172 + $0x40] sm:$0xf]
      %v711 = vld [vmem:[%s172 + $0x44] sm:$0xf]
      %v712 = vld [vmem:[%s172 + $0x48] sm:$0xf]
      %v713 = vld [vmem:[%s172 + $0x4c] sm:$0xf]
      %v714 = vld [vmem:[%s172 + $0x50] sm:$0xf]
      %v715 = vld [vmem:[%s172 + $0x54] sm:$0xf]
      %v716 = vld [vmem:[%s172 + $0x58] sm:$0xf]
      %v717 = vld [vmem:[%s172 + $0x5c] sm:$0xf]
      %v718 = vld [vmem:[%s172 + $0x60] sm:$0xf]
      %v719 = vld [vmem:[%s172 + $0x64] sm:$0xf]
      %v720 = vld [vmem:[%s172 + $0x68] sm:$0xf]
      %v721 = vld [vmem:[%s172 + $0x6c] sm:$0xf]
      %v722 = vld [vmem:[%s172 + $0x70] sm:$0xf]
      %v723 = vld [vmem:[%s172 + $0x74] sm:$0xf]
      %v724 = vld [vmem:[%s172 + $0x78] sm:$0xf]
      %v725 = vld [vmem:[%s172 + $0x7c] sm:$0xf]
      %v726 = vld [vmem:[%s172 + $0x80] sm:$0xf]
      %v727 = vld [vmem:[%s172 + $0x84] sm:$0xf]
      %v728 = vld [vmem:[%s172 + $0x88] sm:$0xf]
      %v729 = vld [vmem:[%s172 + $0x8c] sm:$0xf]
      %s730 = scalar_lea.vmem %s1, 16
      %v731 = vld [vmem:[%s730] sm:$0xf]
      %v732 = vld [vmem:[%s730 + $0x4] sm:$0x3]
      %v765 = vunpack.c.l.b16 %v698
      %v766 = vunpack.c.l.b16 %v699
      %v767 = vunpack.c.l.b16 %v700
      %v768 = vunpack.c.l.b16 %v701
      %v769 = vunpack.c.l.b16 %v702
      %v770 = vunpack.c.l.b16 %v703
      %v771 = vunpack.c.l.b16 %v704
      %v772 = vunpack.c.l.b16 %v705
      %v773 = vunpack.c.l.b16 %v706
      %v774 = vunpack.c.l.b16 %v707
      %v775 = vunpack.c.l.b16 %v708
      %v776 = vunpack.c.l.b16 %v709
      %v777 = vunpack.c.l.b16 %v710
      %v778 = vunpack.c.l.b16 %v711
      %v779 = vunpack.c.l.b16 %v712
      %v780 = vunpack.c.l.b16 %v713
      %v781 = vunpack.c.l.b16 %v714
      %v782 = vunpack.c.l.b16 %v715
      %v783 = vunpack.c.l.b16 %v716
      %v784 = vunpack.c.l.b16 %v717
      %v785 = vunpack.c.l.b16 %v718
      %v786 = vunpack.c.l.b16 %v719
      %v787 = vunpack.c.l.b16 %v720
      %v788 = vunpack.c.l.b16 %v721
      %v789 = vunpack.c.l.b16 %v722
      %v790 = vunpack.c.l.b16 %v723
      %v791 = vunpack.c.l.b16 %v724
      %v792 = vunpack.c.l.b16 %v725
      %v793 = vunpack.c.l.b16 %v726
      %v794 = vunpack.c.l.b16 %v727
      %v795 = vunpack.c.l.b16 %v728
      %v796 = vunpack.c.l.b16 %v729
      %v797 = vpack.c.b16 %v766, %v765
      %v798 = vpack.c.b16 %v768, %v767
      %v799 = vpack.c.b16 %v770, %v769
      %v800 = vpack.c.b16 %v772, %v771
      %v801 = vpack.c.b16 %v774, %v773
      %v802 = vpack.c.b16 %v776, %v775
      %v803 = vpack.c.b16 %v778, %v777
      %v804 = vpack.c.b16 %v780, %v779
      %v805 = vpack.c.b16 %v782, %v781
      %v806 = vpack.c.b16 %v784, %v783
      %v807 = vpack.c.b16 %v786, %v785
      %v808 = vpack.c.b16 %v788, %v787
      %v809 = vpack.c.b16 %v790, %v789
      %v810 = vpack.c.b16 %v792, %v791
      %v811 = vpack.c.b16 %v794, %v793
      %v812 = vpack.c.b16 %v796, %v795
      %v815 = vunpack.c.l.b16 %v731
      %v816 = vunpack.c.l.b16 %v732
      %v817 = vpack.c.b16 %v816, %v815
      %v819 = vsel %vm307, %v797, 0
      %v822 = vsel %vm307, %v798, 0
      %v825 = vsel %vm307, %v799, 0
      %v828 = vsel %vm307, %v800, 0
      %v831 = vsel %vm307, %v801, 0
      %v834 = vsel %vm307, %v802, 0
      %v837 = vsel %vm307, %v803, 0
      %v840 = vsel %vm307, %v804, 0
      %v843 = vsel %vm307, %v805, 0
      %v846 = vsel %vm307, %v806, 0
      %v849 = vsel %vm307, %v807, 0
      %v852 = vsel %vm307, %v808, 0
      %v855 = vsel %vm307, %v809, 0
      %v858 = vsel %vm307, %v810, 0
      %v861 = vsel %vm307, %v811, 0
      %v864 = vsel %vm307, %v812, 0
      %v867 = vsel %vm356, %v817, 0
      %869 = vmatprep.subr.bf16.mxu0 0
      %870 = vmatpush1.bf16.msra.mxu0 %v867
      %871 = vmatprep.subr.bf16.mxu0 0
      %872 = vmatpush1.bf16.msra.mxu0 0
      %873 = vmatprep.subr.bf16.mxu0 0
      %874 = vmatpush1.bf16.msra.mxu0 0
      %875 = vmatprep.subr.bf16.mxu0 0
      %876 = vmatpush1.bf16.msra.mxu0 0
      %877 = vmatprep.subr.bf16.mxu0 0
      %878 = vmatpush1.bf16.msra.mxu0 0
      %879 = vmatprep.subr.bf16.mxu0 0
      %880 = vmatpush1.bf16.msra.mxu0 0
      %881 = vmatprep.subr.bf16.mxu0 0
      %882 = vmatpush1.bf16.msra.mxu0 0
      %883 = vmatprep.subr.bf16.mxu0 0
      %884 = vmatpush1.bf16.msra.mxu0 0
      %885 = vmatprep.subr.bf16.mxu0 0
      %886 = vmatpush1.bf16.msra.mxu0 0
      %887 = vmatprep.subr.bf16.mxu0 0
      %888 = vmatpush1.bf16.msra.mxu0 0
      %889 = vmatprep.subr.bf16.mxu0 0
      %890 = vmatpush1.bf16.msra.mxu0 0
      %891 = vmatprep.subr.bf16.mxu0 0
      %892 = vmatpush1.bf16.msra.mxu0 0
      %893 = vmatprep.subr.bf16.mxu0 0
      %894 = vmatpush1.bf16.msra.mxu0 0
      %895 = vmatprep.subr.bf16.mxu0 0
      %896 = vmatpush1.bf16.msra.mxu0 0
      %897 = vmatprep.subr.bf16.mxu0 0
      %898 = vmatpush1.bf16.msra.mxu0 0
      %899 = vmatprep.subr.bf16.mxu0 0
      %900 = vmatpush1.bf16.msra.mxu0 0
      %901 = vmatprep.mubr.bf16.mxu0 0
      %902 = vmatmul.mubr.bf16.gmra.mrb[0].mxu0 %v819
      %v903 = vpop.f32.mrb[0].mxu0
      %v904 = vadd.f32 0.0, %v903
      %v905 = vpop.f32.mrb[0].mxu0
      %v906 = vpop.f32.mrb[0].mxu0
      %v907 = vadd.f32 0.0, %v906
      %v908 = vpop.f32.mrb[0].mxu0
      %909 = vmatprep.mubr.bf16.mxu0 0
      %910 = vmatmul.mubr.bf16.gmra.mrb[0].mxu0 %v822
      %v911 = vpop.f32.mrb[0].mxu0
      %v912 = vadd.f32 0.0, %v911
      %v913 = vpop.f32.mrb[0].mxu0
      %v914 = vpop.f32.mrb[0].mxu0
      %v915 = vadd.f32 0.0, %v914
      %v916 = vpop.f32.mrb[0].mxu0
      %917 = vmatprep.mubr.bf16.mxu0 0
      %918 = vmatmul.mubr.bf16.gmra.mrb[0].mxu0 %v825
      %v919 = vpop.f32.mrb[0].mxu0
      %v920 = vadd.f32 0.0, %v919
      %v921 = vpop.f32.mrb[0].mxu0
      %v922 = vpop.f32.mrb[0].mxu0
      %v923 = vadd.f32 0.0, %v922
      %v924 = vpop.f32.mrb[0].mxu0
      %925 = vmatprep.mubr.bf16.mxu0 0
      %926 = vmatmul.mubr.bf16.gmra.mrb[0].mxu0 %v828
      %v927 = vpop.f32.mrb[0].mxu0
      %v928 = vadd.f32 0.0, %v927
      %v929 = vpop.f32.mrb[0].mxu0
      %v930 = vpop.f32.mrb[0].mxu0
      %v931 = vadd.f32 0.0, %v930
      %v932 = vpop.f32.mrb[0].mxu0
      %933 = vmatprep.mubr.bf16.mxu0 0
      %934 = vmatmul.mubr.bf16.gmra.mrb[0].mxu0 %v831
      %v935 = vpop.f32.mrb[0].mxu0
      %v936 = vadd.f32 0.0, %v935
      %v937 = vpop.f32.mrb[0].mxu0
      %v938 = vpop.f32.mrb[0].mxu0
      %v939 = vadd.f32 0.0, %v938
      %v940 = vpop.f32.mrb[0].mxu0
      %941 = vmatprep.mubr.bf16.mxu0 0
      %942 = vmatmul.mubr.bf16.gmra.mrb[0].mxu0 %v834
      %v943 = vpop.f32.mrb[0].mxu0
      %v944 = vadd.f32 0.0, %v943
      %v945 = vpop.f32.mrb[0].mxu0
      %v946 = vpop.f32.mrb[0].mxu0
      %v947 = vadd.f32 0.0, %v946
      %v948 = vpop.f32.mrb[0].mxu0
      %949 = vmatprep.mubr.bf16.mxu0 0
      %950 = vmatmul.mubr.bf16.gmra.mrb[0].mxu0 %v837
      %v951 = vpop.f32.mrb[0].mxu0
      %v952 = vadd.f32 0.0, %v951
      %v953 = vpop.f32.mrb[0].mxu0
      %v954 = vpop.f32.mrb[0].mxu0
      %v955 = vadd.f32 0.0, %v954
      %v956 = vpop.f32.mrb[0].mxu0
      %957 = vmatprep.mubr.bf16.mxu0 0
      %958 = vmatmul.mubr.bf16.gmra.mrb[0].mxu0 %v840
      %v959 = vpop.f32.mrb[0].mxu0
      %v960 = vadd.f32 0.0, %v959
      %v961 = vpop.f32.mrb[0].mxu0
      %v962 = vpop.f32.mrb[0].mxu0
      %v963 = vadd.f32 0.0, %v962
      %v964 = vpop.f32.mrb[0].mxu0
      %965 = vmatprep.mubr.bf16.mxu0 0
      %966 = vmatmul.mubr.bf16.gmra.mrb[0].mxu0 %v843
      %v967 = vpop.f32.mrb[0].mxu0
      %v968 = vadd.f32 0.0, %v967
      %v969 = vpop.f32.mrb[0].mxu0
      %v970 = vpop.f32.mrb[0].mxu0
      %v971 = vadd.f32 0.0, %v970
      %v972 = vpop.f32.mrb[0].mxu0
      %973 = vmatprep.mubr.bf16.mxu0 0
      %974 = vmatmul.mubr.bf16.gmra.mrb[0].mxu0 %v846
      %v975 = vpop.f32.mrb[0].mxu0
      %v976 = vadd.f32 0.0, %v975
      %v977 = vpop.f32.mrb[0].mxu0
      %v978 = vpop.f32.mrb[0].mxu0
      %v979 = vadd.f32 0.0, %v978
      %v980 = vpop.f32.mrb[0].mxu0
      %981 = vmatprep.mubr.bf16.mxu0 0
      %982 = vmatmul.mubr.bf16.gmra.mrb[0].mxu0 %v849
      %v983 = vpop.f32.mrb[0].mxu0
      %v984 = vadd.f32 0.0, %v983
      %v985 = vpop.f32.mrb[0].mxu0
      %v986 = vpop.f32.mrb[0].mxu0
      %v987 = vadd.f32 0.0, %v986
      %v988 = vpop.f32.mrb[0].mxu0
      %989 = vmatprep.mubr.bf16.mxu0 0
      %990 = vmatmul.mubr.bf16.gmra.mrb[0].mxu0 %v852
      %v991 = vpop.f32.mrb[0].mxu0
      %v992 = vadd.f32 0.0, %v991
      %v993 = vpop.f32.mrb[0].mxu0
      %v994 = vpop.f32.mrb[0].mxu0
      %v995 = vadd.f32 0.0, %v994
      %v996 = vpop.f32.mrb[0].mxu0
      %997 = vmatprep.mubr.bf16.mxu0 0
      %998 = vmatmul.mubr.bf16.gmra.mrb[0].mxu0 %v855
      %v999 = vpop.f32.mrb[0].mxu0
      %v1000 = vadd.f32 0.0, %v999
      %v1001 = vpop.f32.mrb[0].mxu0
      %v1002 = vpop.f32.mrb[0].mxu0
      %v1003 = vadd.f32 0.0, %v1002
      %v1004 = vpop.f32.mrb[0].mxu0
      %1005 = vmatprep.mubr.bf16.mxu0 0
      %1006 = vmatmul.mubr.bf16.gmra.mrb[0].mxu0 %v858
      %v1007 = vpop.f32.mrb[0].mxu0
      %v1008 = vadd.f32 0.0, %v1007
      %v1009 = vpop.f32.mrb[0].mxu0
      %v1010 = vpop.f32.mrb[0].mxu0
      %v1011 = vadd.f32 0.0, %v1010
      %v1012 = vpop.f32.mrb[0].mxu0
      %1013 = vmatprep.mubr.bf16.mxu0 0
      %1014 = vmatmul.mubr.bf16.gmra.mrb[0].mxu0 %v861
      %v1015 = vpop.f32.mrb[0].mxu0
      %v1016 = vadd.f32 0.0, %v1015
      %v1017 = vpop.f32.mrb[0].mxu0
      %v1018 = vpop.f32.mrb[0].mxu0
      %v1019 = vadd.f32 0.0, %v1018
      %v1020 = vpop.f32.mrb[0].mxu0
      %1021 = vmatprep.mubr.bf16.mxu0 0
      %1022 = vmatmul.mubr.bf16.gmra.mrb[0].mxu0 %v864
      %v1023 = vpop.f32.mrb[0].mxu0
      %v1024 = vadd.f32 0.0, %v1023
      %v1025 = vpop.f32.mrb[0].mxu0
      %v1026 = vpop.f32.mrb[0].mxu0
      %v1027 = vadd.f32 0.0, %v1026
      %v1028 = vpop.f32.mrb[0].mxu0
      %1029 = vdwg.mxu0
      %v1030 = vadd.f32 %v572, %v904
      %v1031 = vadd.f32 %v575, %v907
      %v1032 = vadd.f32 %v580, %v912
      %v1033 = vadd.f32 %v583, %v915
      %v1034 = vadd.f32 %v588, %v920
      %v1035 = vadd.f32 %v591, %v923
      %v1036 = vadd.f32 %v596, %v928
      %v1037 = vadd.f32 %v599, %v931
      %v1038 = vadd.f32 %v604, %v936
      %v1039 = vadd.f32 %v607, %v939
      %v1040 = vadd.f32 %v612, %v944
      %v1041 = vadd.f32 %v615, %v947
      %v1042 = vadd.f32 %v620, %v952
      %v1043 = vadd.f32 %v623, %v955
      %v1044 = vadd.f32 %v628, %v960
      %v1045 = vadd.f32 %v631, %v963
      %v1046 = vadd.f32 %v636, %v968
      %v1047 = vadd.f32 %v639, %v971
      %v1048 = vadd.f32 %v644, %v976
      %v1049 = vadd.f32 %v647, %v979
      %v1050 = vadd.f32 %v652, %v984
      %v1051 = vadd.f32 %v655, %v987
      %v1052 = vadd.f32 %v660, %v992
      %v1053 = vadd.f32 %v663, %v995
      %v1054 = vadd.f32 %v668, %v1000
      %v1055 = vadd.f32 %v671, %v1003
      %v1056 = vadd.f32 %v676, %v1008
      %v1057 = vadd.f32 %v679, %v1011
      %v1058 = vadd.f32 %v684, %v1016
      %v1059 = vadd.f32 %v687, %v1019
      %v1060 = vadd.f32 %v692, %v1024
      %v1061 = vadd.f32 %v695, %v1027
      %v1062 = vpack.c.bf16 %v1031, %v1030
      %v1063 = vpack.c.bf16 %v1033, %v1032
      %v1064 = vpack.c.bf16 %v1035, %v1034
      %v1065 = vpack.c.bf16 %v1037, %v1036
      %v1066 = vpack.c.bf16 %v1039, %v1038
      %v1067 = vpack.c.bf16 %v1041, %v1040
      %v1068 = vpack.c.bf16 %v1043, %v1042
      %v1069 = vpack.c.bf16 %v1045, %v1044
      %v1070 = vpack.c.bf16 %v1047, %v1046
      %v1071 = vpack.c.bf16 %v1049, %v1048
      %v1072 = vpack.c.bf16 %v1051, %v1050
      %v1073 = vpack.c.bf16 %v1053, %v1052
      %v1074 = vpack.c.bf16 %v1055, %v1054
      %v1075 = vpack.c.bf16 %v1057, %v1056
      %v1076 = vpack.c.bf16 %v1059, %v1058
      %v1077 = vpack.c.bf16 %v1061, %v1060
      %v1094 = vunpack.c.l.b16 %v1062
      %v1095 = vunpack.c.h.b16 %v1062
      %v1096 = vunpack.c.l.b16 %v1063
      %v1097 = vunpack.c.h.b16 %v1063
      %v1098 = vunpack.c.l.b16 %v1064
      %v1099 = vunpack.c.h.b16 %v1064
      %v1100 = vunpack.c.l.b16 %v1065
      %v1101 = vunpack.c.h.b16 %v1065
      %v1102 = vunpack.c.l.b16 %v1066
      %v1103 = vunpack.c.h.b16 %v1066
      %v1104 = vunpack.c.l.b16 %v1067
      %v1105 = vunpack.c.h.b16 %v1067
      %v1106 = vunpack.c.l.b16 %v1068
      %v1107 = vunpack.c.h.b16 %v1068
      %v1108 = vunpack.c.l.b16 %v1069
      %v1109 = vunpack.c.h.b16 %v1069
      %v1110 = vunpack.c.l.b16 %v1070
      %v1111 = vunpack.c.h.b16 %v1070
      %v1112 = vunpack.c.l.b16 %v1071
      %v1113 = vunpack.c.h.b16 %v1071
      %v1114 = vunpack.c.l.b16 %v1072
      %v1115 = vunpack.c.h.b16 %v1072
      %v1116 = vunpack.c.l.b16 %v1073
      %v1117 = vunpack.c.h.b16 %v1073
      %v1118 = vunpack.c.l.b16 %v1074
      %v1119 = vunpack.c.h.b16 %v1074
      %v1120 = vunpack.c.l.b16 %v1075
      %v1121 = vunpack.c.h.b16 %v1075
      %v1122 = vunpack.c.l.b16 %v1076
      %v1123 = vunpack.c.h.b16 %v1076
      %v1124 = vunpack.c.l.b16 %v1077
      %v1125 = vunpack.c.h.b16 %v1077
      %v1126 = vpack.c.b16 %v1094, %v1094
      %v1127 = vpack.c.b16 %v1095, %v1095
      %v1128 = vpack.c.b16 %v1096, %v1096
      %v1129 = vpack.c.b16 %v1097, %v1097
      %v1130 = vpack.c.b16 %v1098, %v1098
      %v1131 = vpack.c.b16 %v1099, %v1099
      %v1132 = vpack.c.b16 %v1100, %v1100
      %v1133 = vpack.c.b16 %v1101, %v1101
      %v1134 = vpack.c.b16 %v1102, %v1102
      %v1135 = vpack.c.b16 %v1103, %v1103
      %v1136 = vpack.c.b16 %v1104, %v1104
      %v1137 = vpack.c.b16 %v1105, %v1105
      %v1138 = vpack.c.b16 %v1106, %v1106
      %v1139 = vpack.c.b16 %v1107, %v1107
      %v1140 = vpack.c.b16 %v1108, %v1108
      %v1141 = vpack.c.b16 %v1109, %v1109
      %v1142 = vpack.c.b16 %v1110, %v1110
      %v1143 = vpack.c.b16 %v1111, %v1111
      %v1144 = vpack.c.b16 %v1112, %v1112
      %v1145 = vpack.c.b16 %v1113, %v1113
      %v1146 = vpack.c.b16 %v1114, %v1114
      %v1147 = vpack.c.b16 %v1115, %v1115
      %v1148 = vpack.c.b16 %v1116, %v1116
      %v1149 = vpack.c.b16 %v1117, %v1117
      %v1150 = vpack.c.b16 %v1118, %v1118
      %v1151 = vpack.c.b16 %v1119, %v1119
      %v1152 = vpack.c.b16 %v1120, %v1120
      %v1153 = vpack.c.b16 %v1121, %v1121
      %v1154 = vpack.c.b16 %v1122, %v1122
      %v1155 = vpack.c.b16 %v1123, %v1123
      %v1156 = vpack.c.b16 %v1124, %v1124
      %v1157 = vpack.c.b16 %v1125, %v1125
      %1190 = vst [vmem:[%s177] sm:$0xf] %v1126
      %1191 = vst [vmem:[%s177 + $0x4] sm:$0xf] %v1127
      %1192 = vst [vmem:[%s177 + $0x8] sm:$0xf] %v1128
      %1193 = vst [vmem:[%s177 + $0xc] sm:$0xf] %v1129
      %1194 = vst [vmem:[%s177 + $0x10] sm:$0xf] %v1130
      %1195 = vst [vmem:[%s177 + $0x14] sm:$0xf] %v1131
      %1196 = vst [vmem:[%s177 + $0x18] sm:$0xf] %v1132
      %1197 = vst [vmem:[%s177 + $0x1c] sm:$0xf] %v1133
      %1198 = vst [vmem:[%s177 + $0x20] sm:$0xf] %v1134
      %1199 = vst [vmem:[%s177 + $0x24] sm:$0xf] %v1135
      %1200 = vst [vmem:[%s177 + $0x28] sm:$0xf] %v1136
      %1201 = vst [vmem:[%s177 + $0x2c] sm:$0xf] %v1137
      %1202 = vst [vmem:[%s177 + $0x30] sm:$0xf] %v1138
      %1203 = vst [vmem:[%s177 + $0x34] sm:$0xf] %v1139
      %1204 = vst [vmem:[%s177 + $0x38] sm:$0xf] %v1140
      %1205 = vst [vmem:[%s177 + $0x3c] sm:$0xf] %v1141
      %1206 = vst [vmem:[%s177 + $0x40] sm:$0xf] %v1142
      %1207 = vst [vmem:[%s177 + $0x44] sm:$0xf] %v1143
      %1208 = vst [vmem:[%s177 + $0x48] sm:$0xf] %v1144
      %1209 = vst [vmem:[%s177 + $0x4c] sm:$0xf] %v1145
      %1210 = vst [vmem:[%s177 + $0x50] sm:$0xf] %v1146
      %1211 = vst [vmem:[%s177 + $0x54] sm:$0xf] %v1147
      %1212 = vst [vmem:[%s177 + $0x58] sm:$0xf] %v1148
      %1213 = vst [vmem:[%s177 + $0x5c] sm:$0xf] %v1149
      %1214 = vst [vmem:[%s177 + $0x60] sm:$0xf] %v1150
      %1215 = vst [vmem:[%s177 + $0x64] sm:$0xf] %v1151
      %1216 = vst [vmem:[%s177 + $0x68] sm:$0xf] %v1152
      %1217 = vst [vmem:[%s177 + $0x6c] sm:$0xf] %v1153
      %1218 = vst [vmem:[%s177 + $0x70] sm:$0xf] %v1154
      %1219 = vst [vmem:[%s177 + $0x74] sm:$0xf] %v1155
      %1220 = vst [vmem:[%s177 + $0x78] sm:$0xf] %v1156
      %1221 = vst [vmem:[%s177 + $0x7c] sm:$0xf] %v1157
      %v1222 = vadd.f32 %v1030, %v1031
      %v1223 = vadd.f32 %v1222, %v1032
      %v1224 = vadd.f32 %v1223, %v1033
      %v1225 = vadd.f32 %v1224, %v1034
      %v1226 = vadd.f32 %v1225, %v1035
      %v1227 = vadd.f32 %v1226, %v1036
      %v1228 = vadd.f32 %v1227, %v1037
      %v1229 = vadd.f32 %v1228, %v1038
      %v1230 = vadd.f32 %v1229, %v1039
      %v1231 = vadd.f32 %v1230, %v1040
      %v1232 = vadd.f32 %v1231, %v1041
      %v1233 = vadd.f32 %v1232, %v1042
      %v1234 = vadd.f32 %v1233, %v1043
      %v1235 = vadd.f32 %v1234, %v1044
      %v1236 = vadd.f32 %v1235, %v1045
      %v1237 = vadd.f32 %v1236, %v1046
      %v1238 = vadd.f32 %v1237, %v1047
      %v1239 = vadd.f32 %v1238, %v1048
      %v1240 = vadd.f32 %v1239, %v1049
      %v1241 = vadd.f32 %v1240, %v1050
      %v1242 = vadd.f32 %v1241, %v1051
      %v1243 = vadd.f32 %v1242, %v1052
      %v1244 = vadd.f32 %v1243, %v1053
      %v1245 = vadd.f32 %v1244, %v1054
      %v1246 = vadd.f32 %v1245, %v1055
      %v1247 = vadd.f32 %v1246, %v1056
      %v1248 = vadd.f32 %v1247, %v1057
      %v1249 = vadd.f32 %v1248, %v1058
      %v1250 = vadd.f32 %v1249, %v1059
      %v1251 = vadd.f32 %v1250, %v1060
      %v1252 = vadd.f32 %v1251, %v1061
      %v1253 = vrot.slane %v1252, 4
      %v1254 = vadd.f32 %v1252, %v1253
      %v1255 = vrot.slane %v1254, 2
      %v1256 = vadd.f32 %v1254, %v1255
      %v1257 = vrot.slane %v1256, 1
      %v1258 = vadd.f32 %v1256, %v1257
      %v1259 = vmul.f32 %v1258, 0.00390625
      %v1260 = vsub.f32 %v1030, %v1259
      %v1261 = vsub.f32 %v1031, %v1259
      %v1262 = vsub.f32 %v1032, %v1259
      %v1263 = vsub.f32 %v1033, %v1259
      %v1264 = vsub.f32 %v1034, %v1259
      %v1265 = vsub.f32 %v1035, %v1259
      %v1266 = vsub.f32 %v1036, %v1259
      %v1267 = vsub.f32 %v1037, %v1259
      %v1268 = vsub.f32 %v1038, %v1259
      %v1269 = vsub.f32 %v1039, %v1259
      %v1270 = vsub.f32 %v1040, %v1259
      %v1271 = vsub.f32 %v1041, %v1259
      %v1272 = vsub.f32 %v1042, %v1259
      %v1273 = vsub.f32 %v1043, %v1259
      %v1274 = vsub.f32 %v1044, %v1259
      %v1275 = vsub.f32 %v1045, %v1259
      %v1276 = vsub.f32 %v1046, %v1259
      %v1277 = vsub.f32 %v1047, %v1259
      %v1278 = vsub.f32 %v1048, %v1259
      %v1279 = vsub.f32 %v1049, %v1259
      %v1280 = vsub.f32 %v1050, %v1259
      %v1281 = vsub.f32 %v1051, %v1259
      %v1282 = vsub.f32 %v1052, %v1259
      %v1283 = vsub.f32 %v1053, %v1259
      %v1284 = vsub.f32 %v1054, %v1259
      %v1285 = vsub.f32 %v1055, %v1259
      %v1286 = vsub.f32 %v1056, %v1259
      %v1287 = vsub.f32 %v1057, %v1259
      %v1288 = vsub.f32 %v1058, %v1259
      %v1289 = vsub.f32 %v1059, %v1259
      %v1290 = vsub.f32 %v1060, %v1259
      %v1291 = vsub.f32 %v1061, %v1259
      %1292 = vst [vmem:[%s181] sm:$0x1] %v1258
      %v1293 = vmul.f32 %v1260, %v1260
      %v1294 = vmul.f32 %v1261, %v1261
      %v1295 = vmul.f32 %v1262, %v1262
      %v1296 = vmul.f32 %v1263, %v1263
      %v1297 = vmul.f32 %v1264, %v1264
      %v1298 = vmul.f32 %v1265, %v1265
      %v1299 = vmul.f32 %v1266, %v1266
      %v1300 = vmul.f32 %v1267, %v1267
      %v1301 = vmul.f32 %v1268, %v1268
      %v1302 = vmul.f32 %v1269, %v1269
      %v1303 = vmul.f32 %v1270, %v1270
      %v1304 = vmul.f32 %v1271, %v1271
      %v1305 = vmul.f32 %v1272, %v1272
      %v1306 = vmul.f32 %v1273, %v1273
      %v1307 = vmul.f32 %v1274, %v1274
      %v1308 = vmul.f32 %v1275, %v1275
      %v1309 = vmul.f32 %v1276, %v1276
      %v1310 = vmul.f32 %v1277, %v1277
      %v1311 = vmul.f32 %v1278, %v1278
      %v1312 = vmul.f32 %v1279, %v1279
      %v1313 = vmul.f32 %v1280, %v1280
      %v1314 = vmul.f32 %v1281, %v1281
      %v1315 = vmul.f32 %v1282, %v1282
      %v1316 = vmul.f32 %v1283, %v1283
      %v1317 = vmul.f32 %v1284, %v1284
      %v1318 = vmul.f32 %v1285, %v1285
      %v1319 = vmul.f32 %v1286, %v1286
      %v1320 = vmul.f32 %v1287, %v1287
      %v1321 = vmul.f32 %v1288, %v1288
      %v1322 = vmul.f32 %v1289, %v1289
      %v1323 = vmul.f32 %v1290, %v1290
      %v1324 = vmul.f32 %v1291, %v1291
      %v1325 = vadd.f32 %v1293, %v1294
      %v1326 = vadd.f32 %v1325, %v1295
      %v1327 = vadd.f32 %v1326, %v1296
      %v1328 = vadd.f32 %v1327, %v1297
      %v1329 = vadd.f32 %v1328, %v1298
      %v1330 = vadd.f32 %v1329, %v1299
      %v1331 = vadd.f32 %v1330, %v1300
      %v1332 = vadd.f32 %v1331, %v1301
      %v1333 = vadd.f32 %v1332, %v1302
      %v1334 = vadd.f32 %v1333, %v1303
      %v1335 = vadd.f32 %v1334, %v1304
      %v1336 = vadd.f32 %v1335, %v1305
      %v1337 = vadd.f32 %v1336, %v1306
      %v1338 = vadd.f32 %v1337, %v1307
      %v1339 = vadd.f32 %v1338, %v1308
      %v1340 = vadd.f32 %v1339, %v1309
      %v1341 = vadd.f32 %v1340, %v1310
      %v1342 = vadd.f32 %v1341, %v1311
      %v1343 = vadd.f32 %v1342, %v1312
      %v1344 = vadd.f32 %v1343, %v1313
      %v1345 = vadd.f32 %v1344, %v1314
      %v1346 = vadd.f32 %v1345, %v1315
      %v1347 = vadd.f32 %v1346, %v1316
      %v1348 = vadd.f32 %v1347, %v1317
      %v1349 = vadd.f32 %v1348, %v1318
      %v1350 = vadd.f32 %v1349, %v1319
      %v1351 = vadd.f32 %v1350, %v1320
      %v1352 = vadd.f32 %v1351, %v1321
      %v1353 = vadd.f32 %v1352, %v1322
      %v1354 = vadd.f32 %v1353, %v1323
      %v1355 = vadd.f32 %v1354, %v1324
      %v1356 = vrot.slane %v1355, 4
      %v1357 = vadd.f32 %v1355, %v1356
      %v1358 = vrot.slane %v1357, 2
      %v1359 = vadd.f32 %v1357, %v1358
      %v1360 = vrot.slane %v1359, 1
      %v1361 = vadd.f32 %v1359, %v1360
      %1362 = vst [vmem:[%s181 + $0x1] sm:$0x1] %v1361
      %p1363 = scmp.lt.s32.totalorder %s15, 1
      %s1364 = scalar_select %p1363, %s15, 1
      %s1365 = smul.addr %s1364, 32
      %s1366 = smul.addr %s1365, 4
      %s1367 = scalar_lea.vmem %s2, %s1366
      %p1368 = scmp.lt.s32.totalorder %s15, 1
      %s1369 = scalar_select %p1368, %s15, 1
      %s1370 = smul.addr %s1369, 2
      %s1371 = scalar_lea.vmem %s3, %s1370
      // Predicated region
      $region29: #{conv_norm_relu.2} parent=27 // pred_check
        %p1372 = pneg %p80
      $region30: #{conv_norm_relu.2} parent=27 // pred_check_branch
        %1374 = sbr.rel (%p1372) target = $region32
      $region31: #{conv_norm_relu.2} parent=27 // pred_region
        _
      $region32: #{conv_norm_relu.2} parent=27 // pred_fallthru
        _
      // Predicated region
      $region33: #{conv_norm_relu.2} parent=27 // pred_check
        %p1375 = pneg %p106
      $region34: #{conv_norm_relu.2} parent=27 // pred_check_branch
        %1377 = sbr.rel (%p1375) target = $region36
      $region35: #{conv_norm_relu.2} parent=27 // pred_region
        _
      $region36: #{conv_norm_relu.2} parent=27 // pred_fallthru
        _
    $region28: #{conv_norm_relu.2} parent=5 // pred_fallthru
      _
    %p1378 = scmp.le.s32.totalorder 2, %s10
    // Predicated region
    $region37: #{conv_norm_relu.2} parent=5 // pred_check
      %p1379 = pneg %p1378
    $region38: #{conv_norm_relu.2} parent=5 // pred_check_branch
      %1381 = sbr.rel (%p1379) target = $region40
    $region39: #{conv_norm_relu.2} parent=5 // pred_region
      %s1382 = ssub.s32 %s10, 2
      // Predicated region
      $region41: #{conv_norm_relu.2} parent=39 // pred_check
        %p1383 = pneg %p86
      $region42: #{conv_norm_relu.2} parent=39 // pred_check_branch
        %1385 = sbr.rel (%p1383) target = $region44
      $region43: #{conv_norm_relu.2} parent=39 // pred_region
        %p1386 = scmp.lt.s32.totalorder %s16, 1
        %s1387 = scalar_select %p1386, %s16, 1
        %s1388 = smul.addr %s1387, 32
        %s1389 = smul.addr %s1388, 4
        %s1390 = scalar_lea.vmem %s2, %s1389
      $region44: #{conv_norm_relu.2} parent=39 // pred_fallthru
        _
      // Predicated region
      $region45: #{conv_norm_relu.2} parent=39 // pred_check
        %p1391 = pneg %p112
      $region46: #{conv_norm_relu.2} parent=39 // pred_check_branch
        %1393 = sbr.rel (%p1391) target = $region48
      $region47: #{conv_norm_relu.2} parent=39 // pred_region
        %p1394 = scmp.lt.s32.totalorder %s16, 1
        %s1395 = scalar_select %p1394, %s16, 1
        %s1396 = smul.addr %s1395, 2
        %s1397 = scalar_lea.vmem %s3, %s1396
      $region48: #{conv_norm_relu.2} parent=39 // pred_fallthru
        _
    $region40: #{conv_norm_relu.2} parent=5 // pred_fallthru
      _
  $region6: #{conv_norm_relu.2} parent=0 // loop_footer
    %s14 = sadd.s32 1, %s10
  $region7: #{conv_norm_relu.2} parent=0 // loop_footer_branch
    %9 = sbr.rel target = $region3
  $region8: #{conv_norm_relu.2} parent=0 // loop_exit
    _

</llo_original>
